<compile_context>
chip_gen: v6e
topology: v6e:2x2x1
jax: 0.10.0
libtpu: 0.0.40
codegen_flags: <defaults>
</compile_context>

<pallas_src>
import jax
import jax.numpy as jnp
from jax.experimental import pallas as pl
from jax.experimental.pallas import tpu as pltpu

NUM_JOINTS = 24
NUM_BETAS = 10
POSE_FEATS = 9 * (NUM_JOINTS - 1)          # 207
BLEND_FEATS = NUM_BETAS + POSE_FEATS       # 217
V_ALIGN = 1024                             # vertex padding granularity
# SMPL kintree parents (kintree_table[0]); root parent is -1.
KINTREE_PARENTS = [-1, 0, 0, 0, 1, 2, 3, 4, 5, 6, 7, 8, 9, 9, 9, 12, 13, 14,
                   16, 17, 18, 19, 20, 21]


def _round_up(x, m):
    return ((x + m - 1) // m) * m


def _pick_tile(total, desired, quantum=128):
    """Largest multiple of `quantum` that divides `total` and is <= desired."""
    assert total % quantum == 0
    t = max(quantum, min(desired, total))
    t = (t // quantum) * quantum
    while total % t != 0:
        t -= quantum
    return t


# --------------------------------------------------------------------------
# Pallas kernel 1: fused shape+pose blend (c-major flattened vertex axis)
#   naked[b, c*Vp + v] = v_template[c, v] + sum_k coefs[b, k] * bd[k, c*Vp+v]
#   coefs = [betas | pose_map] (bf16), bd = [shapedirs ; posedirs] (bf16).
# --------------------------------------------------------------------------
def _blend_kernel(coefs_ref, vt_ref, bd_ref, naked_ref):
    # bf16 x bf16 MXU dot, f32 accumulation; no in-kernel promotion.
    naked_ref[...] = vt_ref[...] + jnp.dot(
        coefs_ref[...], bd_ref[...], preferred_element_type=jnp.float32)


def blend_shapes(coefs_bf16, v_template_flat, blenddirs_T, *, tile):
    B = coefs_bf16.shape[0]
    F = v_template_flat.shape[1]           # 3*Vp
    grid = (F // tile,)
    return pl.pallas_call(
        _blend_kernel,
        out_shape=jax.ShapeDtypeStruct((B, F), jnp.float32),
        grid_spec=pltpu.PrefetchScalarGridSpec(
            num_scalar_prefetch=0,
            grid=grid,
            in_specs=[
                pl.BlockSpec((B, BLEND_FEATS), lambda i: (0, 0)),
                pl.BlockSpec((1, tile), lambda i: (0, i)),
                pl.BlockSpec((BLEND_FEATS, tile), lambda i: (0, i)),
            ],
            out_specs=pl.BlockSpec((B, tile), lambda i: (0, i))),
        compiler_params=pltpu.CompilerParams(
            dimension_semantics=("parallel",)),    # no accumulator
    )(coefs_bf16, v_template_flat, blenddirs_T)


# --------------------------------------------------------------------------
# Pallas kernel 2: linear blend skinning (fully vectorized over batch & rows)
#   g:   (4, 3B, 24) bf16, row r = x*B + b holds the scale/trans-folded
#        transform entry M'[b, x, y, j] for column y = leading index.
#   wT:  (24, Vp) bf16 skinning weights.
#   vpr: (3, 3B, Vp) f32, vpr[y, x*B+b, v] = v_posed[b, y, v] (x-broadcast).
#   out: (3B, Vp) f32, row x*B+b = skinned vertex coordinate x.
# --------------------------------------------------------------------------
def _lbs_kernel(g_ref, wT_ref, vpr_ref, out_ref):
    w = wT_ref[...]                                                  # (24, T)
    acc = jnp.dot(g_ref[3], w, preferred_element_type=jnp.float32)   # translation
    for y in range(3):                     # static, 3 full-slab FMAs
        acc = acc + jnp.dot(g_ref[y], w,
                            preferred_element_type=jnp.float32) * vpr_ref[y]
    out_ref[...] = acc


def lbs_skin(g4, weights_T, vpr, *, tile):
    rows = vpr.shape[1]                    # 3 * batch
    Vp = weights_T.shape[1]
    grid = (Vp // tile,)
    return pl.pallas_call(
        _lbs_kernel,
        out_shape=jax.ShapeDtypeStruct((rows, Vp), jnp.float32),
        grid_spec=pltpu.PrefetchScalarGridSpec(
            num_scalar_prefetch=0,
            grid=grid,
            in_specs=[
                pl.BlockSpec((4, rows, NUM_JOINTS), lambda i: (0, 0, 0)),
                pl.BlockSpec((NUM_JOINTS, tile), lambda i: (0, i)),
                pl.BlockSpec((3, rows, tile), lambda i: (0, 0, i)),
            ],
            out_specs=pl.BlockSpec((rows, tile), lambda i: (0, i))),
        compiler_params=pltpu.CompilerParams(
            dimension_semantics=("parallel",)),
    )(g4, weights_T, vpr)


# --------------------------------------------------------------------------
# Plain-JAX glue: Rodrigues + kinematic chain (tiny, sequential)
# --------------------------------------------------------------------------
def rodrigues(axisang):
    """axis-angle (N, 3) -> rotation matrices (N, 3, 3)."""
    angle = jnp.linalg.norm(axisang + 1e-8, axis=1, keepdims=True)   # (N,1)
    axis = axisang / angle
    ca = jnp.cos(angle)[:, :, None]
    sa = jnp.sin(angle)[:, :, None]
    x, y, z = axis[:, 0:1], axis[:, 1:2], axis[:, 2:3]
    zeros = jnp.zeros_like(x)
    K = jnp.stack([
        jnp.concatenate([zeros, -z, y], axis=1),
        jnp.concatenate([z, zeros, -x], axis=1),
        jnp.concatenate([-y, x, zeros], axis=1)], axis=1)            # (N,3,3)
    outer = axis[:, :, None] * axis[:, None, :]
    eye = jnp.eye(3, dtype=axisang.dtype)[None]
    return ca * eye + (1.0 - ca) * outer + sa * K


def kinematic_chain(rotmats, th_j):
    """rotmats (B,24,3,3), th_j (B,24,3) -> (results_global, results2)."""
    B = rotmats.shape[0]
    f32 = rotmats.dtype
    bottom = jnp.tile(jnp.array([[[0., 0., 0., 1.]]], dtype=f32), (B, 1, 1))

    def with_zeros(m34):
        return jnp.concatenate([m34, bottom], axis=1)

    results = [with_zeros(jnp.concatenate(
        [rotmats[:, 0], th_j[:, 0, :, None]], axis=2))]
    for i in range(1, NUM_JOINTS):
        parent = KINTREE_PARENTS[i]
        rel = with_zeros(jnp.concatenate(
            [rotmats[:, i], (th_j[:, i] - th_j[:, parent])[:, :, None]],
            axis=2))
        results.append(jnp.matmul(results[parent], rel))
    results_global = jnp.stack(results, axis=1)                      # (B,24,4,4)

    j_h = jnp.concatenate([th_j, jnp.zeros((B, NUM_JOINTS, 1), f32)], axis=2)
    tmp = jnp.einsum('bjxy,bjy->bjx', results_global, j_h)           # (B,24,4)
    pack = jnp.concatenate(
        [jnp.zeros((B, NUM_JOINTS, 4, 3), f32), tmp[..., None]], axis=3)
    results2 = results_global - pack                                 # (B,24,4,4)
    return results_global, results2


# --------------------------------------------------------------------------
# Full forward (matches SMPL_Layer.forward with normalise=False, hands=False)
# --------------------------------------------------------------------------
def smpl_forward(pose, betas, trans, params, scale=1.0, th_offsets=None,
                 tile_blend=5376, tile_lbs=3584):
    B = pose.shape[0]
    V = params["v_template"].shape[0]
    Vp = params["Vp"]
    F = 3 * Vp
    tile_blend = _pick_tile(F, tile_blend)
    tile_lbs = _pick_tile(Vp, tile_lbs)
    f32 = jnp.float32

    rotmats = rodrigues(pose.reshape(B * NUM_JOINTS, 3)).reshape(
        B, NUM_JOINTS, 3, 3)
    id_flat = jnp.tile(jnp.eye(3, dtype=f32).reshape(1, 9),
                       (1, NUM_JOINTS - 1))
    pose_map = rotmats[:, 1:].reshape(B, POSE_FEATS) - id_flat        # (B,207)

    # ---- Pallas kernel 1: fused shape+pose blend (single output) ----------
    coefs = jnp.concatenate([betas.astype(f32), pose_map],
                            axis=1).astype(jnp.bfloat16)              # (B,217)
    naked_flat = blend_shapes(coefs, params["v_template_flat"],
                              params["blenddirs_T"], tile=tile_blend)
    naked3 = naked_flat.reshape(B, 3, Vp)      # free reshape (c-major layout)

    # Joint regression from precomputed J_vt / J_sd (no v_shaped round trip).
    th_j = params["J_vt"][None] + jnp.einsum(
        'jck,bk->bjc', params["J_sd"], betas.astype(f32))             # (B,24,3)

    naked = jnp.transpose(naked3[:, :, :V], (0, 2, 1))                # (B,V,3)
    if th_offsets is not None:
        off3 = jnp.pad(jnp.transpose(th_offsets.astype(f32), (0, 2, 1)),
                       ((0, 0), (0, 0), (0, Vp - V)))
        v_posed3 = naked3 + off3
        v_posed = jnp.transpose(v_posed3[:, :, :V], (0, 2, 1))
    else:
        v_posed3 = naked3
        v_posed = naked

    # ---- kinematic chain (tiny, sequential; plain JAX) ---------------------
    results_global, results2 = kinematic_chain(rotmats, th_j)

    # Fold scale into the rotation part and trans into the translation column
    # (valid because SMPL skinning-weight rows sum to 1); drop the x=3 row.
    A = results2[:, :, :3, :] * jnp.asarray(scale, f32)               # (B,24,3,4)
    A = A.at[:, :, :, 3].add(trans.astype(f32)[:, None, :])
    # g4[y, x*B+b, j] = A[b, j, x, y]  (bf16 for the MXU).
    g4 = jnp.transpose(A, (3, 2, 0, 1)).reshape(
        4, 3 * B, NUM_JOINTS).astype(jnp.bfloat16)

    # x-broadcast of v_posed for the fully vectorized LBS kernel:
    # vpr[y, x*B+b, v] = v_posed[b, y, v]  (small XLA tile, sub-MB).
    vpT = jnp.transpose(v_posed3, (1, 0, 2))                          # (3,B,Vp)
    vpr = jnp.tile(vpT, (1, 3, 1))                                    # (3,3B,Vp)

    # ---- Pallas kernel 2: linear blend skinning ----------------------------
    verts_rows = lbs_skin(g4, params["weights_T"], vpr, tile=tile_lbs)  # (3B,Vp)
    verts3x = verts_rows.reshape(3, B, Vp)     # free reshape (row = x*B + b)
    verts = jnp.transpose(verts3x[:, :, :V], (1, 2, 0))               # (B,V,3)

    jtr = results_global[:, :, :3, 3] * scale + trans[:, None, :]
    return verts, jtr, v_posed, naked, results_global


# --------------------------------------------------------------------------
# Pure-JAX reference (mirrors the PyTorch math) for validation
# --------------------------------------------------------------------------
def smpl_reference(pose, betas, trans, params, scale=1.0):
    B = pose.shape[0]
    V = params["v_template"].shape[0]
    rotmats = rodrigues(pose.reshape(B * NUM_JOINTS, 3)).reshape(
        B, NUM_JOINTS, 3, 3)
    id_flat = jnp.tile(jnp.eye(3, dtype=jnp.float32).reshape(1, 9),
                       (1, NUM_JOINTS - 1))
    pose_map = rotmats[:, 1:].reshape(B, POSE_FEATS) - id_flat
    v_shaped = params["v_template"][None] + jnp.einsum(
        'vck,bk->bvc', params["shapedirs"], betas)
    th_j = jnp.einsum('jv,bvc->bjc', params["j_regressor"], v_shaped)
    naked = v_shaped + jnp.einsum('vcp,bp->bvc', params["posedirs"], pose_map)
    v_posed = naked
    results_global, results2 = kinematic_chain(rotmats, th_j)
    T = jnp.einsum('bjxy,vj->bxyv', results2, params["weights"])      # (B,4,4,V)
    rest_h = jnp.concatenate(
        [jnp.transpose(v_posed, (0, 2, 1)), jnp.ones((B, 1, V), jnp.float32)],
        axis=1)                                                       # (B,4,V)
    verts = jnp.transpose((T * rest_h[:, None]).sum(2), (0, 2, 1))[:, :, :3]
    verts = verts * scale + trans[:, None]
    jtr = results_global[:, :, :3, 3] * scale + trans[:, None]
    return verts, jtr, v_posed, naked, results_global


# --------------------------------------------------------------------------
# Parameter preparation: pad V, build kernel-friendly layouts, bf16 storage
# for the HBM-heavy blend dirs / skinning weights, precomputed joint terms.
# --------------------------------------------------------------------------
def prepare_kernel_params(v_template, shapedirs, posedirs, j_regressor,
                          weights, v_align=V_ALIGN):
    V = v_template.shape[0]
    Vp = _round_up(V, v_align)
    pad = Vp - V
    f32 = jnp.float32
    vt = jnp.pad(v_template.T, ((0, 0), (0, pad)))                    # (3, Vp)
    sd = jnp.pad(jnp.transpose(shapedirs, (2, 1, 0)),
                 ((0, 0), (0, 0), (0, pad)))                          # (10,3,Vp)
    pdirs = jnp.pad(jnp.transpose(posedirs, (2, 1, 0)),
                    ((0, 0), (0, 0), (0, pad)))                       # (207,3,Vp)
    blenddirs = jnp.concatenate(
        [sd.reshape(NUM_BETAS, 3 * Vp), pdirs.reshape(POSE_FEATS, 3 * Vp)],
        axis=0)                                                       # (217,3Vp)
    return dict(
        Vp=Vp,
        v_template_flat=vt.reshape(1, 3 * Vp).astype(f32),
        blenddirs_T=blenddirs.astype(jnp.bfloat16),
        # Precomputed joint-regression terms (replace the v_shaped output):
        J_vt=(j_regressor @ v_template).astype(f32),                  # (24,3)
        J_sd=jnp.einsum('jv,vck->jck', j_regressor,
                        shapedirs).astype(f32),                       # (24,3,10)
        weights_T=jnp.pad(weights.T,
                          ((0, 0), (0, pad))).astype(jnp.bfloat16),   # (24,Vp)
    )


# --------------------------------------------------------------------------
# Deterministic synthetic "model" parameters (stand-in for the .pkl buffers)
# --------------------------------------------------------------------------
def make_params(key, V):
    ks = jax.random.split(key, 5)
    v_template = jax.random.normal(ks[0], (V, 3), jnp.float32) * 0.5
    shapedirs = jax.random.normal(ks[1], (V, 3, NUM_BETAS), jnp.float32) * 0.03
    posedirs = jax.random.normal(ks[2], (V, 3, POSE_FEATS), jnp.float32) * 0.01
    j_regressor = jax.nn.softmax(
        jax.random.normal(ks[3], (NUM_JOINTS, V), jnp.float32), axis=1)
    # skinning weights rows sum to 1 (true for SMPL); required for the
    # host-side scale/trans fold in smpl_forward.
    weights = jax.nn.softmax(
        jax.random.normal(ks[4], (V, NUM_JOINTS), jnp.float32) * 2.0, axis=1)
    params = dict(
        v_template=v_template,
        shapedirs=shapedirs,
        posedirs=posedirs,
        j_regressor=j_regressor,
        weights=weights,
    )
    params.update(prepare_kernel_params(
        v_template, shapedirs, posedirs, j_regressor, weights))
    return params


if __name__ == "__main__":
    key = jax.random.PRNGKey(0)
    kp, kpose, kbeta, ktrans = jax.random.split(key, 4)

    B, V = 2, 512  # small synthetic mesh (real SMPL has V=6890)
    params = make_params(kp, V)
    pose = jax.random.normal(kpose, (B, 72), jnp.float32) * 0.3
    betas = jax.random.normal(kbeta, (B, NUM_BETAS), jnp.float32)
    trans = jax.random.normal(ktrans, (B, 3), jnp.float32)
    scale = 1.0

    outs = smpl_forward(pose, betas, trans, params, scale=scale)
    outs = jax.block_until_ready(outs)
    verts, jtr, v_posed, naked, results_global = outs

    ref = jax.block_until_ready(
        smpl_reference(pose, betas, trans, params, scale=scale))

    ok = verts.shape == (B, V, 3) and jtr.shape == (B, NUM_JOINTS, 3)
    ok = ok and v_posed.shape == (B, V, 3) and naked.shape == (B, V, 3)
    ok = ok and results_global.shape == (B, NUM_JOINTS, 4, 4)
    for a, b in zip(outs, ref):
        ok = ok and bool(jnp.all(jnp.isfinite(a)))
        ok = ok and bool(jnp.allclose(a, b, rtol=5e-2, atol=5e-2))

    if ok:
        print("KERNEL_OK")
    else:
        print("KERNEL_MISMATCH")
</pallas_src>

<mosaic_0001>
module attributes {stable_mosaic.version = 11 : i64} {
  func.func @_blend_kernel(%arg0: i32, %arg1: memref<2x217xbf16, #tpu.memory_space<vmem>>, %arg2: memref<1x3072xf32, #tpu.memory_space<vmem>>, %arg3: memref<217x3072xbf16, #tpu.memory_space<vmem>>, %arg4: memref<2x3072xf32, #tpu.memory_space<vmem>>) attributes {dimension_semantics = [#tpu.dimension_semantics<parallel>], iteration_bounds = array<i64: 1>, scalar_prefetch = 0 : i64, scratch_operands = 0 : i64, tpu.core_type = #tpu.core_type<tc>, window_params = [{pipeline_mode = #tpu.pipeline_mode<synchronous>, transform_indices = @transform_0, window_bounds = array<i64: 2, 217>}, {transform_indices = @transform_1, window_bounds = array<i64: 1, 3072>}, {transform_indices = @transform_2, window_bounds = array<i64: 217, 3072>}, {transform_indices = @transform_3, window_bounds = array<i64: 2, 3072>}]} {
    %c0 = arith.constant 0 : index
    %c0_0 = arith.constant 0 : index
    %0 = vector.load %arg2[%c0, %c0_0] : memref<1x3072xf32, #tpu.memory_space<vmem>>, vector<1x3072xf32>
    %c0_1 = arith.constant 0 : index
    %c0_2 = arith.constant 0 : index
    %1 = vector.load %arg1[%c0_1, %c0_2] : memref<2x217xbf16, #tpu.memory_space<vmem>>, vector<2x217xbf16>
    %c0_3 = arith.constant 0 : index
    %c0_4 = arith.constant 0 : index
    %2 = vector.load %arg3[%c0_3, %c0_4] : memref<217x3072xbf16, #tpu.memory_space<vmem>>, vector<217x3072xbf16>
    %cst = arith.constant dense<0.000000e+00> : vector<2x3072xf32>
    %3 = tpu.matmul %1, %2, %cst {dimension_numbers = #tpu.dot_dimension_numbers<[1], [0], [0], [1], [0, 0, 1, 1], [], []>} : vector<2x217xbf16>, vector<217x3072xbf16>, vector<2x3072xf32> -> vector<2x3072xf32>
    %4 = vector.broadcast %0 : vector<1x3072xf32> to vector<2x3072xf32>
    %5 = arith.addf %4, %3 : vector<2x3072xf32>
    %c0_5 = arith.constant 0 : index
    %c0_6 = arith.constant 0 : index
    %6 = vector.load %arg4[%c0_5, %c0_6] : memref<2x3072xf32, #tpu.memory_space<vmem>>, vector<2x3072xf32>
    tpu.vector_store %arg4[%c0_5, %c0_6], %5 {strides = array<i32>} : memref<2x3072xf32, #tpu.memory_space<vmem>>, vector<2x3072xf32>,
    return
  }
  func.func @transform_0(%arg0: i32) -> (i32, i32) {
    %c0_i32 = arith.constant 0 : i32
    %c0_i32_0 = arith.constant 0 : i32
    %c0_i32_1 = arith.constant 0 : i32
    return %c0_i32, %c0_i32_0 : i32, i32
  }
  func.func @transform_1(%arg0: i32) -> (i32, i32) {
    %c0_i32 = arith.constant 0 : i32
    %c0_i32_0 = arith.constant 0 : i32
    return %c0_i32, %arg0 : i32, i32
  }
  func.func @transform_2(%arg0: i32) -> (i32, i32) {
    %c0_i32 = arith.constant 0 : i32
    %c0_i32_0 = arith.constant 0 : i32
    return %c0_i32, %arg0 : i32, i32
  }
  func.func @transform_3(%arg0: i32) -> (i32, i32) {
    %c0_i32 = arith.constant 0 : i32
    %c0_i32_0 = arith.constant 0 : i32
    return %c0_i32, %arg0 : i32, i32
  }
}

</mosaic_0001>

<llo_original>
// kernel: tpu_custom_call.1
$region0: #{tpu_custom_call.1}
  #allocation0 [shape = 'u32[]', space=smem, size = 0x4, offset = 0x4, fixed_abs, tag = 'smem constant byte address 0x4 - core index']
  #allocation1 [shape = 'u32[144,128]{1,0:T(1,128)}', space=vmem, size = 0x12000, scoped, tag = 'internal scratch']
  %s0 = inlined_call_operand.hbm [shape: bf16[2,217], index: 0, kind: input, shape index: {}]
  %s1 = inlined_call_operand.hbm [shape: f32[1,3072], index: 1, kind: input, shape index: {}]
  %s2 = inlined_call_operand.hbm [shape: bf16[217,3072], index: 2, kind: input, shape index: {}]
  %s3 = inlined_call_operand.hbm [shape: f32[2,3072], index: 3, kind: output, shape index: {}]
  %s4 = sld [smem:[#allocation0]]
  $region34: #{tpu_custom_call.1} parent=0
    _
  %s6 = ssub.s32 1, %s4
  %s7 = scalar_select 0, %s6, %s4
  $region1: #{tpu_custom_call.1} parent=0
    #allocation2 [shape = 'u8[1024]{0}', space=vmem, size = 0x400, scoped, tag = 'input window, operand 0, single buffered']
    #allocation3 [shape = 's32[1]{0}', space=sflag, size = 0x4, scoped, tag = 'scoped memory for tpu_custom_call.1']
    #allocation4 [shape = 's32[1]{0}', space=sflag, size = 0x4, scoped, tag = 'scoped memory for tpu_custom_call.1']
    #allocation5 [shape = 'u8[12288]{0}', space=vmem, size = 0x3000, scoped, tag = 'input window, operand 1, single buffered']
    #allocation6 [shape = 's32[1]{0}', space=sflag, size = 0x4, scoped, tag = 'scoped memory for tpu_custom_call.1']
    #allocation7 [shape = 'u8[1376256]{0}', space=vmem, size = 0x150000, scoped, tag = 'input window, operand 2, single buffered']
    #allocation8 [shape = 'u8[24576]{0}', space=vmem, size = 0x6000, scoped, tag = 'output window, operand 0, single buffered']
    %8 = vsyncpa [#allocation3], 0
    %9 = vsyncpa [#allocation6], 0
    %10 = vsyncpa [#allocation4], 0
    // Predicated region
    $region2: #{tpu_custom_call.1} parent=1 // pred_check
      _
    $region3: #{tpu_custom_call.1} parent=1 // pred_check_branch
      %12 = sbr.rel (0) target = $region5
    $region4: #{tpu_custom_call.1} parent=1 // pred_region
      %s14 = ssub.s32 32, 32
      %15 = vsyncadd [#allocation3], %s14
      %s17 = sshll.u32 [#allocation2], 4
      %s18 = int_to_ptr.vmem [resolvable:$true] %s17
      %20 = dma.hbm_to_vmem [thread:$0]  %s0, 32, %s18, [#allocation3]
    $region5: #{tpu_custom_call.1} parent=1 // pred_fallthru
      _
    // Predicated region
    $region6: #{tpu_custom_call.1} parent=1 // pred_check
      _
    $region7: #{tpu_custom_call.1} parent=1 // pred_check_branch
      %22 = sbr.rel (0) target = $region9
    $region8: #{tpu_custom_call.1} parent=1 // pred_region
      %s24 = ssub.s32 384, 384
      %25 = vsyncadd [#allocation6], %s24
      %s27 = sshll.u32 [#allocation5], 4
      %s28 = int_to_ptr.vmem [resolvable:$true] %s27
      %30 = dma.hbm_to_vmem [thread:$0]  %s1, 384, %s28, [#allocation6]
    $region9: #{tpu_custom_call.1} parent=1 // pred_fallthru
      _
    // Predicated region
    $region10: #{tpu_custom_call.1} parent=1 // pred_check
      _
    $region11: #{tpu_custom_call.1} parent=1 // pred_check_branch
      %32 = sbr.rel (0) target = $region13
    $region12: #{tpu_custom_call.1} parent=1 // pred_region
      %s34 = ssub.s32 43008, 43008
      %35 = vsyncadd [#allocation6], %s34
      %s36 = sshll.u32 [#allocation7], 4
      %s37 = int_to_ptr.vmem [resolvable:$true] %s36
      %42 = dma.hbm_to_vmem [thread:$0]  %s2, 43008, %s37, [#allocation6], 1536, 1536, 96
    $region13: #{tpu_custom_call.1} parent=1 // pred_fallthru
      _
    // Predicated region
    $region14: #{tpu_custom_call.1} parent=1 // pred_check
      _
    $region15: #{tpu_custom_call.1} parent=1 // pred_check_branch
      %44 = sbr.rel (0) target = $region17
    $region16: #{tpu_custom_call.1} parent=1 // pred_region
      %45 = dma.done [#allocation3], 32
    $region17: #{tpu_custom_call.1} parent=1 // pred_fallthru
      _
    // Predicated region
    $region18: #{tpu_custom_call.1} parent=1 // pred_check
      _
    $region19: #{tpu_custom_call.1} parent=1 // pred_check_branch
      %47 = sbr.rel (0) target = $region21
    $region20: #{tpu_custom_call.1} parent=1 // pred_region
      %48 = dma.done [#allocation6], 384
    $region21: #{tpu_custom_call.1} parent=1 // pred_fallthru
      _
    // Predicated region
    $region22: #{tpu_custom_call.1} parent=1 // pred_check
      _
    $region23: #{tpu_custom_call.1} parent=1 // pred_check_branch
      %50 = sbr.rel (0) target = $region25
    $region24: #{tpu_custom_call.1} parent=1 // pred_region
      %51 = dma.done [#allocation6], 43008
    $region25: #{tpu_custom_call.1} parent=1 // pred_fallthru
      _
    %v53 = vld [vmem:[#allocation5] sm:$0xff]
    %v54 = vld [vmem:[#allocation5 + $0x8] sm:$0xff]
    %v55 = vld [vmem:[#allocation5 + $0x10] sm:$0xff]
    %v56 = vld [vmem:[#allocation2] sm:$0x3]
    %v57 = vld [vmem:[#allocation7] sm:$0xff]
    %v58 = vld [vmem:[#allocation7 + $0x8] sm:$0xff]
    %v59 = vld [vmem:[#allocation7 + $0x10] sm:$0xff]
    %v60 = vld [vmem:[#allocation7 + $0x18] sm:$0xff]
    %v61 = vld [vmem:[#allocation7 + $0x20] sm:$0xff]
    %v62 = vld [vmem:[#allocation7 + $0x28] sm:$0xff]
    %v63 = vld [vmem:[#allocation7 + $0x30] sm:$0xff]
    %v64 = vld [vmem:[#allocation7 + $0x38] sm:$0xff]
    %v65 = vld [vmem:[#allocation7 + $0x40] sm:$0xff]
    %v66 = vld [vmem:[#allocation7 + $0x48] sm:$0xff]
    %v67 = vld [vmem:[#allocation7 + $0x50] sm:$0xff]
    %v68 = vld [vmem:[#allocation7 + $0x58] sm:$0xff]
    %v69 = vld [vmem:[#allocation7 + $0x60] sm:$0xff]
    %v70 = vld [vmem:[#allocation7 + $0x68] sm:$0xff]
    %v71 = vld [vmem:[#allocation7 + $0x70] sm:$0xff]
    %v72 = vld [vmem:[#allocation7 + $0x78] sm:$0xff]
    %v73 = vld [vmem:[#allocation7 + $0x80] sm:$0xff]
    %v74 = vld [vmem:[#allocation7 + $0x88] sm:$0xff]
    %v75 = vld [vmem:[#allocation7 + $0x90] sm:$0xff]
    %v76 = vld [vmem:[#allocation7 + $0x98] sm:$0xff]
    %v77 = vld [vmem:[#allocation7 + $0xa0] sm:$0xff]
    %v78 = vld [vmem:[#allocation7 + $0xa8] sm:$0xff]
    %v79 = vld [vmem:[#allocation7 + $0xb0] sm:$0xff]
    %v80 = vld [vmem:[#allocation7 + $0xb8] sm:$0xff]
    %v81 = vld [vmem:[#allocation7 + $0xc0] sm:$0xff]
    %v82 = vld [vmem:[#allocation7 + $0xc8] sm:$0xff]
    %v83 = vld [vmem:[#allocation7 + $0xd0] sm:$0xff]
    %v84 = vld [vmem:[#allocation7 + $0xd8] sm:$0xff]
    %v85 = vld [vmem:[#allocation7 + $0xe0] sm:$0xff]
    %v86 = vld [vmem:[#allocation7 + $0xe8] sm:$0xff]
    %v87 = vld [vmem:[#allocation7 + $0xf0] sm:$0xff]
    %v88 = vld [vmem:[#allocation7 + $0xf8] sm:$0xff]
    %v89 = vld [vmem:[#allocation7 + $0x100] sm:$0xff]
    %v90 = vld [vmem:[#allocation7 + $0x108] sm:$0xff]
    %v91 = vld [vmem:[#allocation7 + $0x110] sm:$0xff]
    %v92 = vld [vmem:[#allocation7 + $0x118] sm:$0xff]
    %v93 = vld [vmem:[#allocation7 + $0x120] sm:$0xff]
    %v94 = vld [vmem:[#allocation7 + $0x128] sm:$0xff]
    %v95 = vld [vmem:[#allocation7 + $0x130] sm:$0xff]
    %v96 = vld [vmem:[#allocation7 + $0x138] sm:$0xff]
    %v97 = vld [vmem:[#allocation7 + $0x140] sm:$0xff]
    %v98 = vld [vmem:[#allocation7 + $0x148] sm:$0xff]
    %v99 = vld [vmem:[#allocation7 + $0x150] sm:$0xff]
    %v100 = vld [vmem:[#allocation7 + $0x158] sm:$0xff]
    %v101 = vld [vmem:[#allocation7 + $0x160] sm:$0xff]
    %v102 = vld [vmem:[#allocation7 + $0x168] sm:$0xff]
    %v103 = vld [vmem:[#allocation7 + $0x170] sm:$0xff]
    %v104 = vld [vmem:[#allocation7 + $0x178] sm:$0xff]
    %v105 = vld [vmem:[#allocation7 + $0x180] sm:$0xff]
    %v106 = vld [vmem:[#allocation7 + $0x188] sm:$0xff]
    %v107 = vld [vmem:[#allocation7 + $0x190] sm:$0xff]
    %v108 = vld [vmem:[#allocation7 + $0x198] sm:$0xff]
    %v109 = vld [vmem:[#allocation7 + $0x1a0] sm:$0xff]
    %v110 = vld [vmem:[#allocation7 + $0x1a8] sm:$0xff]
    %v111 = vld [vmem:[#allocation7 + $0x1b0] sm:$0xff]
    %v112 = vld [vmem:[#allocation7 + $0x1b8] sm:$0xff]
    %v113 = vld [vmem:[#allocation7 + $0x1c0] sm:$0xff]
    %v114 = vld [vmem:[#allocation7 + $0x1c8] sm:$0xff]
    %v115 = vld [vmem:[#allocation7 + $0x1d0] sm:$0xff]
    %v116 = vld [vmem:[#allocation7 + $0x1d8] sm:$0xff]
    %v117 = vld [vmem:[#allocation7 + $0x1e0] sm:$0xff]
    %v118 = vld [vmem:[#allocation7 + $0x1e8] sm:$0xff]
    %v119 = vld [vmem:[#allocation7 + $0x1f0] sm:$0xff]
    %v120 = vld [vmem:[#allocation7 + $0x1f8] sm:$0xff]
    %v121 = vld [vmem:[#allocation7 + $0x200] sm:$0xff]
    %v122 = vld [vmem:[#allocation7 + $0x208] sm:$0xff]
    %v123 = vld [vmem:[#allocation7 + $0x210] sm:$0xff]
    %v124 = vld [vmem:[#allocation7 + $0x218] sm:$0xff]
    %v125 = vld [vmem:[#allocation7 + $0x220] sm:$0xff]
    %v126 = vld [vmem:[#allocation7 + $0x228] sm:$0xff]
    %v127 = vld [vmem:[#allocation7 + $0x230] sm:$0xff]
    %v128 = vld [vmem:[#allocation7 + $0x238] sm:$0xff]
    %v129 = vld [vmem:[#allocation7 + $0x240] sm:$0xff]
    %v130 = vld [vmem:[#allocation7 + $0x248] sm:$0xff]
    %v131 = vld [vmem:[#allocation7 + $0x250] sm:$0xff]
    %v132 = vld [vmem:[#allocation7 + $0x258] sm:$0xff]
    %v133 = vld [vmem:[#allocation7 + $0x260] sm:$0xff]
    %v134 = vld [vmem:[#allocation7 + $0x268] sm:$0xff]
    %v135 = vld [vmem:[#allocation7 + $0x270] sm:$0xff]
    %v136 = vld [vmem:[#allocation7 + $0x278] sm:$0xff]
    %v137 = vld [vmem:[#allocation7 + $0x280] sm:$0xff]
    %v138 = vld [vmem:[#allocation7 + $0x288] sm:$0xff]
    %v139 = vld [vmem:[#allocation7 + $0x290] sm:$0xff]
    %v140 = vld [vmem:[#allocation7 + $0x298] sm:$0xff]
    %v141 = vld [vmem:[#allocation7 + $0x2a0] sm:$0xff]
    %v142 = vld [vmem:[#allocation7 + $0x2a8] sm:$0xff]
    %v143 = vld [vmem:[#allocation7 + $0x2b0] sm:$0xff]
    %v144 = vld [vmem:[#allocation7 + $0x2b8] sm:$0xff]
    %v145 = vld [vmem:[#allocation7 + $0x2c0] sm:$0xff]
    %v146 = vld [vmem:[#allocation7 + $0x2c8] sm:$0xff]
    %v147 = vld [vmem:[#allocation7 + $0x2d0] sm:$0xff]
    %v148 = vld [vmem:[#allocation7 + $0x2d8] sm:$0xff]
    %v149 = vld [vmem:[#allocation7 + $0x2e0] sm:$0xff]
    %v150 = vld [vmem:[#allocation7 + $0x2e8] sm:$0xff]
    %v151 = vld [vmem:[#allocation7 + $0x2f0] sm:$0xff]
    %v152 = vld [vmem:[#allocation7 + $0x2f8] sm:$0xff]
    %v153 = vld [vmem:[#allocation7 + $0x300] sm:$0xff]
    %v154 = vld [vmem:[#allocation7 + $0x308] sm:$0xff]
    %v155 = vld [vmem:[#allocation7 + $0x310] sm:$0xff]
    %v156 = vld [vmem:[#allocation7 + $0x318] sm:$0xff]
    %v157 = vld [vmem:[#allocation7 + $0x320] sm:$0xff]
    %v158 = vld [vmem:[#allocation7 + $0x328] sm:$0xff]
    %v159 = vld [vmem:[#allocation7 + $0x330] sm:$0xff]
    %v160 = vld [vmem:[#allocation7 + $0x338] sm:$0xff]
    %v161 = vld [vmem:[#allocation7 + $0x340] sm:$0xff]
    %v162 = vld [vmem:[#allocation7 + $0x348] sm:$0xff]
    %v163 = vld [vmem:[#allocation7 + $0x350] sm:$0xff]
    %v164 = vld [vmem:[#allocation7 + $0x358] sm:$0xff]
    %v165 = vld [vmem:[#allocation7 + $0x360] sm:$0xff]
    %v166 = vld [vmem:[#allocation7 + $0x368] sm:$0xff]
    %v167 = vld [vmem:[#allocation7 + $0x370] sm:$0xff]
    %v168 = vld [vmem:[#allocation7 + $0x378] sm:$0xff]
    %v169 = vld [vmem:[#allocation7 + $0x380] sm:$0xff]
    %v170 = vld [vmem:[#allocation7 + $0x388] sm:$0xff]
    %v171 = vld [vmem:[#allocation7 + $0x390] sm:$0xff]
    %v172 = vld [vmem:[#allocation7 + $0x398] sm:$0xff]
    %v173 = vld [vmem:[#allocation7 + $0x3a0] sm:$0xff]
    %v174 = vld [vmem:[#allocation7 + $0x3a8] sm:$0xff]
    %v175 = vld [vmem:[#allocation7 + $0x3b0] sm:$0xff]
    %v176 = vld [vmem:[#allocation7 + $0x3b8] sm:$0xff]
    %v177 = vld [vmem:[#allocation7 + $0x3c0] sm:$0xff]
    %v178 = vld [vmem:[#allocation7 + $0x3c8] sm:$0xff]
    %v179 = vld [vmem:[#allocation7 + $0x3d0] sm:$0xff]
    %v180 = vld [vmem:[#allocation7 + $0x3d8] sm:$0xff]
    %v181 = vld [vmem:[#allocation7 + $0x3e0] sm:$0xff]
    %v182 = vld [vmem:[#allocation7 + $0x3e8] sm:$0xff]
    %v183 = vld [vmem:[#allocation7 + $0x3f0] sm:$0xff]
    %v184 = vld [vmem:[#allocation7 + $0x3f8] sm:$0xff]
    %v185 = vld [vmem:[#allocation7 + $0x400] sm:$0xff]
    %v186 = vld [vmem:[#allocation7 + $0x408] sm:$0xff]
    %v187 = vld [vmem:[#allocation7 + $0x410] sm:$0xff]
    %v188 = vld [vmem:[#allocation7 + $0x418] sm:$0xff]
    %v189 = vld [vmem:[#allocation7 + $0x420] sm:$0xff]
    %v190 = vld [vmem:[#allocation7 + $0x428] sm:$0xff]
    %v191 = vld [vmem:[#allocation7 + $0x430] sm:$0xff]
    %v192 = vld [vmem:[#allocation7 + $0x438] sm:$0xff]
    %v193 = vld [vmem:[#allocation7 + $0x440] sm:$0xff]
    %v194 = vld [vmem:[#allocation7 + $0x448] sm:$0xff]
    %v195 = vld [vmem:[#allocation7 + $0x450] sm:$0xff]
    %v196 = vld [vmem:[#allocation7 + $0x458] sm:$0xff]
    %v197 = vld [vmem:[#allocation7 + $0x460] sm:$0xff]
    %v198 = vld [vmem:[#allocation7 + $0x468] sm:$0xff]
    %v199 = vld [vmem:[#allocation7 + $0x470] sm:$0xff]
    %v200 = vld [vmem:[#allocation7 + $0x478] sm:$0xff]
    %v201 = vld [vmem:[#allocation7 + $0x480] sm:$0xff]
    %v202 = vld [vmem:[#allocation7 + $0x488] sm:$0xff]
    %v203 = vld [vmem:[#allocation7 + $0x490] sm:$0xff]
    %v204 = vld [vmem:[#allocation7 + $0x498] sm:$0xff]
    %v205 = vld [vmem:[#allocation7 + $0x4a0] sm:$0xff]
    %v206 = vld [vmem:[#allocation7 + $0x4a8] sm:$0xff]
    %v207 = vld [vmem:[#allocation7 + $0x4b0] sm:$0xff]
    %v208 = vld [vmem:[#allocation7 + $0x4b8] sm:$0xff]
    %v209 = vld [vmem:[#allocation7 + $0x4c0] sm:$0xff]
    %v210 = vld [vmem:[#allocation7 + $0x4c8] sm:$0xff]
    %v211 = vld [vmem:[#allocation7 + $0x4d0] sm:$0xff]
    %v212 = vld [vmem:[#allocation7 + $0x4d8] sm:$0xff]
    %v213 = vld [vmem:[#allocation7 + $0x4e0] sm:$0xff]
    %v214 = vld [vmem:[#allocation7 + $0x4e8] sm:$0xff]
    %v215 = vld [vmem:[#allocation7 + $0x4f0] sm:$0xff]
    %v216 = vld [vmem:[#allocation7 + $0x4f8] sm:$0xff]
    %v217 = vld [vmem:[#allocation7 + $0x500] sm:$0xff]
    %v218 = vld [vmem:[#allocation7 + $0x508] sm:$0xff]
    %v219 = vld [vmem:[#allocation7 + $0x510] sm:$0xff]
    %v220 = vld [vmem:[#allocation7 + $0x518] sm:$0xff]
    %v221 = vld [vmem:[#allocation7 + $0x520] sm:$0xff]
    %v222 = vld [vmem:[#allocation7 + $0x528] sm:$0xff]
    %v223 = vld [vmem:[#allocation7 + $0x530] sm:$0xff]
    %v224 = vld [vmem:[#allocation7 + $0x538] sm:$0xff]
    %v225 = vld [vmem:[#allocation7 + $0x540] sm:$0xff]
    %v226 = vld [vmem:[#allocation7 + $0x548] sm:$0xff]
    %v227 = vld [vmem:[#allocation7 + $0x550] sm:$0xff]
    %v228 = vld [vmem:[#allocation7 + $0x558] sm:$0xff]
    %v229 = vld [vmem:[#allocation7 + $0x560] sm:$0xff]
    %v230 = vld [vmem:[#allocation7 + $0x568] sm:$0xff]
    %v231 = vld [vmem:[#allocation7 + $0x570] sm:$0xff]
    %v232 = vld [vmem:[#allocation7 + $0x578] sm:$0xff]
    %v233 = vld [vmem:[#allocation7 + $0x580] sm:$0xff]
    %v234 = vld [vmem:[#allocation7 + $0x588] sm:$0xff]
    %v235 = vld [vmem:[#allocation7 + $0x590] sm:$0xff]
    %v236 = vld [vmem:[#allocation7 + $0x598] sm:$0xff]
    %v237 = vld [vmem:[#allocation7 + $0x5a0] sm:$0xff]
    %v238 = vld [vmem:[#allocation7 + $0x5a8] sm:$0xff]
    %v239 = vld [vmem:[#allocation7 + $0x5b0] sm:$0xff]
    %v240 = vld [vmem:[#allocation7 + $0x5b8] sm:$0xff]
    %v241 = vld [vmem:[#allocation7 + $0x5c0] sm:$0xff]
    %v242 = vld [vmem:[#allocation7 + $0x5c8] sm:$0xff]
    %v243 = vld [vmem:[#allocation7 + $0x5d0] sm:$0xff]
    %v244 = vld [vmem:[#allocation7 + $0x5d8] sm:$0xff]
    %v245 = vld [vmem:[#allocation7 + $0x5e0] sm:$0xff]
    %v246 = vld [vmem:[#allocation7 + $0x5e8] sm:$0xff]
    %v247 = vld [vmem:[#allocation7 + $0x5f0] sm:$0xff]
    %v248 = vld [vmem:[#allocation7 + $0x5f8] sm:$0xff]
    %v249 = vld [vmem:[#allocation7 + $0x600] sm:$0xff]
    %v250 = vld [vmem:[#allocation7 + $0x608] sm:$0xff]
    %v251 = vld [vmem:[#allocation7 + $0x610] sm:$0xff]
    %v252 = vld [vmem:[#allocation7 + $0x618] sm:$0xff]
    %v253 = vld [vmem:[#allocation7 + $0x620] sm:$0xff]
    %v254 = vld [vmem:[#allocation7 + $0x628] sm:$0xff]
    %v255 = vld [vmem:[#allocation7 + $0x630] sm:$0xff]
    %v256 = vld [vmem:[#allocation7 + $0x638] sm:$0xff]
    %v257 = vld [vmem:[#allocation7 + $0x640] sm:$0xff]
    %v258 = vld [vmem:[#allocation7 + $0x648] sm:$0xff]
    %v259 = vld [vmem:[#allocation7 + $0x650] sm:$0xff]
    %v260 = vld [vmem:[#allocation7 + $0x658] sm:$0xff]
    %v261 = vld [vmem:[#allocation7 + $0x660] sm:$0xff]
    %v262 = vld [vmem:[#allocation7 + $0x668] sm:$0xff]
    %v263 = vld [vmem:[#allocation7 + $0x670] sm:$0xff]
    %v264 = vld [vmem:[#allocation7 + $0x678] sm:$0xff]
    %v265 = vld [vmem:[#allocation7 + $0x680] sm:$0xff]
    %v266 = vld [vmem:[#allocation7 + $0x688] sm:$0xff]
    %v267 = vld [vmem:[#allocation7 + $0x690] sm:$0xff]
    %v268 = vld [vmem:[#allocation7 + $0x698] sm:$0xff]
    %v269 = vld [vmem:[#allocation7 + $0x6a0] sm:$0xff]
    %v270 = vld [vmem:[#allocation7 + $0x6a8] sm:$0xff]
    %v271 = vld [vmem:[#allocation7 + $0x6b0] sm:$0xff]
    %v272 = vld [vmem:[#allocation7 + $0x6b8] sm:$0xff]
    %v273 = vld [vmem:[#allocation7 + $0x6c0] sm:$0xff]
    %v274 = vld [vmem:[#allocation7 + $0x6c8] sm:$0xff]
    %v275 = vld [vmem:[#allocation7 + $0x6d0] sm:$0xff]
    %v276 = vld [vmem:[#allocation7 + $0x6d8] sm:$0xff]
    %v277 = vld [vmem:[#allocation7 + $0x6e0] sm:$0xff]
    %v278 = vld [vmem:[#allocation7 + $0x6e8] sm:$0xff]
    %v279 = vld [vmem:[#allocation7 + $0x6f0] sm:$0xff]
    %v280 = vld [vmem:[#allocation7 + $0x6f8] sm:$0xff]
    %v281 = vld [vmem:[#allocation7 + $0x700] sm:$0xff]
    %v282 = vld [vmem:[#allocation7 + $0x708] sm:$0xff]
    %v283 = vld [vmem:[#allocation7 + $0x710] sm:$0xff]
    %v284 = vld [vmem:[#allocation7 + $0x718] sm:$0xff]
    %v285 = vld [vmem:[#allocation7 + $0x720] sm:$0xff]
    %v286 = vld [vmem:[#allocation7 + $0x728] sm:$0xff]
    %v287 = vld [vmem:[#allocation7 + $0x730] sm:$0xff]
    %v288 = vld [vmem:[#allocation7 + $0x738] sm:$0xff]
    %v289 = vld [vmem:[#allocation7 + $0x740] sm:$0xff]
    %v290 = vld [vmem:[#allocation7 + $0x748] sm:$0xff]
    %v291 = vld [vmem:[#allocation7 + $0x750] sm:$0xff]
    %v292 = vld [vmem:[#allocation7 + $0x758] sm:$0xff]
    %v293 = vld [vmem:[#allocation7 + $0x760] sm:$0xff]
    %v294 = vld [vmem:[#allocation7 + $0x768] sm:$0xff]
    %v295 = vld [vmem:[#allocation7 + $0x770] sm:$0xff]
    %v296 = vld [vmem:[#allocation7 + $0x778] sm:$0xff]
    %v297 = vld [vmem:[#allocation7 + $0x780] sm:$0xff]
    %v298 = vld [vmem:[#allocation7 + $0x788] sm:$0xff]
    %v299 = vld [vmem:[#allocation7 + $0x790] sm:$0xff]
    %v300 = vld [vmem:[#allocation7 + $0x798] sm:$0xff]
    %v301 = vld [vmem:[#allocation7 + $0x7a0] sm:$0xff]
    %v302 = vld [vmem:[#allocation7 + $0x7a8] sm:$0xff]
    %v303 = vld [vmem:[#allocation7 + $0x7b0] sm:$0xff]
    %v304 = vld [vmem:[#allocation7 + $0x7b8] sm:$0xff]
    %v305 = vld [vmem:[#allocation7 + $0x7c0] sm:$0xff]
    %v306 = vld [vmem:[#allocation7 + $0x7c8] sm:$0xff]
    %v307 = vld [vmem:[#allocation7 + $0x7d0] sm:$0xff]
    %v308 = vld [vmem:[#allocation7 + $0x7d8] sm:$0xff]
    %v309 = vld [vmem:[#allocation7 + $0x7e0] sm:$0xff]
    %v310 = vld [vmem:[#allocation7 + $0x7e8] sm:$0xff]
    %v311 = vld [vmem:[#allocation7 + $0x7f0] sm:$0xff]
    %v312 = vld [vmem:[#allocation7 + $0x7f8] sm:$0xff]
    %v313 = vld [vmem:[#allocation7 + $0x800] sm:$0xff]
    %v314 = vld [vmem:[#allocation7 + $0x808] sm:$0xff]
    %v315 = vld [vmem:[#allocation7 + $0x810] sm:$0xff]
    %v316 = vld [vmem:[#allocation7 + $0x818] sm:$0xff]
    %v317 = vld [vmem:[#allocation7 + $0x820] sm:$0xff]
    %v318 = vld [vmem:[#allocation7 + $0x828] sm:$0xff]
    %v319 = vld [vmem:[#allocation7 + $0x830] sm:$0xff]
    %v320 = vld [vmem:[#allocation7 + $0x838] sm:$0xff]
    %v321 = vld [vmem:[#allocation7 + $0x840] sm:$0xff]
    %v322 = vld [vmem:[#allocation7 + $0x848] sm:$0xff]
    %v323 = vld [vmem:[#allocation7 + $0x850] sm:$0xff]
    %v324 = vld [vmem:[#allocation7 + $0x858] sm:$0xff]
    %v325 = vld [vmem:[#allocation7 + $0x860] sm:$0xff]
    %v326 = vld [vmem:[#allocation7 + $0x868] sm:$0xff]
    %v327 = vld [vmem:[#allocation7 + $0x870] sm:$0xff]
    %v328 = vld [vmem:[#allocation7 + $0x878] sm:$0xff]
    %v329 = vld [vmem:[#allocation7 + $0x880] sm:$0xff]
    %v330 = vld [vmem:[#allocation7 + $0x888] sm:$0xff]
    %v331 = vld [vmem:[#allocation7 + $0x890] sm:$0xff]
    %v332 = vld [vmem:[#allocation7 + $0x898] sm:$0xff]
    %v333 = vld [vmem:[#allocation7 + $0x8a0] sm:$0xff]
    %v334 = vld [vmem:[#allocation7 + $0x8a8] sm:$0xff]
    %v335 = vld [vmem:[#allocation7 + $0x8b0] sm:$0xff]
    %v336 = vld [vmem:[#allocation7 + $0x8b8] sm:$0xff]
    %v337 = vld [vmem:[#allocation7 + $0x8c0] sm:$0xff]
    %v338 = vld [vmem:[#allocation7 + $0x8c8] sm:$0xff]
    %v339 = vld [vmem:[#allocation7 + $0x8d0] sm:$0xff]
    %v340 = vld [vmem:[#allocation7 + $0x8d8] sm:$0xff]
    %v341 = vld [vmem:[#allocation7 + $0x8e0] sm:$0xff]
    %v342 = vld [vmem:[#allocation7 + $0x8e8] sm:$0xff]
    %v343 = vld [vmem:[#allocation7 + $0x8f0] sm:$0xff]
    %v344 = vld [vmem:[#allocation7 + $0x8f8] sm:$0xff]
    %v345 = vld [vmem:[#allocation7 + $0x900] sm:$0xff]
    %v346 = vld [vmem:[#allocation7 + $0x908] sm:$0xff]
    %v347 = vld [vmem:[#allocation7 + $0x910] sm:$0xff]
    %v348 = vld [vmem:[#allocation7 + $0x918] sm:$0xff]
    %v349 = vld [vmem:[#allocation7 + $0x920] sm:$0xff]
    %v350 = vld [vmem:[#allocation7 + $0x928] sm:$0xff]
    %v351 = vld [vmem:[#allocation7 + $0x930] sm:$0xff]
    %v352 = vld [vmem:[#allocation7 + $0x938] sm:$0xff]
    %v353 = vld [vmem:[#allocation7 + $0x940] sm:$0xff]
    %v354 = vld [vmem:[#allocation7 + $0x948] sm:$0xff]
    %v355 = vld [vmem:[#allocation7 + $0x950] sm:$0xff]
    %v356 = vld [vmem:[#allocation7 + $0x958] sm:$0xff]
    %v357 = vld [vmem:[#allocation7 + $0x960] sm:$0xff]
    %v358 = vld [vmem:[#allocation7 + $0x968] sm:$0xff]
    %v359 = vld [vmem:[#allocation7 + $0x970] sm:$0xff]
    %v360 = vld [vmem:[#allocation7 + $0x978] sm:$0xff]
    %v361 = vld [vmem:[#allocation7 + $0x980] sm:$0xff]
    %v362 = vld [vmem:[#allocation7 + $0x988] sm:$0xff]
    %v363 = vld [vmem:[#allocation7 + $0x990] sm:$0xff]
    %v364 = vld [vmem:[#allocation7 + $0x998] sm:$0xff]
    %v365 = vld [vmem:[#allocation7 + $0x9a0] sm:$0xff]
    %v366 = vld [vmem:[#allocation7 + $0x9a8] sm:$0xff]
    %v367 = vld [vmem:[#allocation7 + $0x9b0] sm:$0xff]
    %v368 = vld [vmem:[#allocation7 + $0x9b8] sm:$0xff]
    %v369 = vld [vmem:[#allocation7 + $0x9c0] sm:$0xff]
    %v370 = vld [vmem:[#allocation7 + $0x9c8] sm:$0xff]
    %v371 = vld [vmem:[#allocation7 + $0x9d0] sm:$0xff]
    %v372 = vld [vmem:[#allocation7 + $0x9d8] sm:$0xff]
    %v373 = vld [vmem:[#allocation7 + $0x9e0] sm:$0xff]
    %v374 = vld [vmem:[#allocation7 + $0x9e8] sm:$0xff]
    %v375 = vld [vmem:[#allocation7 + $0x9f0] sm:$0xff]
    %v376 = vld [vmem:[#allocation7 + $0x9f8] sm:$0xff]
    %v377 = vld [vmem:[#allocation7 + $0xa00] sm:$0xff]
    %v378 = vld [vmem:[#allocation7 + $0xa08] sm:$0xff]
    %v379 = vld [vmem:[#allocation7 + $0xa10] sm:$0xff]
    %v380 = vld [vmem:[#allocation7 + $0xa18] sm:$0xff]
    %v381 = vld [vmem:[#allocation7 + $0xa20] sm:$0x11]
    %v382 = vld [vmem:[#allocation7 + $0xa28] sm:$0x11]
    %v383 = vld [vmem:[#allocation7 + $0xa30] sm:$0x11]
    %v384 = vld [vmem:[#allocation7 + $0xa38] sm:$0x11]
    %v385 = vld [vmem:[#allocation7 + $0xa40] sm:$0x11]
    %v386 = vld [vmem:[#allocation7 + $0xa48] sm:$0x11]
    %v387 = vld [vmem:[#allocation7 + $0xa50] sm:$0x11]
    %v388 = vld [vmem:[#allocation7 + $0xa58] sm:$0x11]
    %v389 = vld [vmem:[#allocation7 + $0xa60] sm:$0x11]
    %v390 = vld [vmem:[#allocation7 + $0xa68] sm:$0x11]
    %v391 = vld [vmem:[#allocation7 + $0xa70] sm:$0x11]
    %v392 = vld [vmem:[#allocation7 + $0xa78] sm:$0x11]
    %v395 = vunpack.c.l.s4 1966171168
    %v396 = vunpack.c.0.s8 %v395
    %v397 = vlaneseq
    %v398 = vshrl.u32 %v397, 7
    %v399 = vsub.s32 %v396, %v398
    %v400 = vrot.slane %v56, %v399
    %v401 = vcombine.high %v400, %v400
    %v403 = vunpack.c.l.s4 1966171168
    %v404 = vunpack.c.0.s8 %v403
    %v405 = vlaneseq
    %v406 = vshrl.u32 %v405, 7
    %v407 = vsub.s32 %v404, %v406
    %v408 = vrot.slane %v400, %v407
    %v410 = vunpack.c.l.s4 1966171168
    %v411 = vunpack.c.0.s8 %v410
    %v412 = vlaneseq
    %v413 = vshrl.u32 %v412, 7
    %v414 = vsub.s32 %v411, %v413
    %v415 = vrot.slane %v401, %v414
    %v753 = vunpack.c.l.b16 %v57
    %v754 = vunpack.c.h.b16 %v57
    %v755 = vunpack.c.l.b16 %v58
    %v756 = vunpack.c.h.b16 %v58
    %v757 = vunpack.c.l.b16 %v59
    %v758 = vunpack.c.h.b16 %v59
    %v759 = vunpack.c.l.b16 %v60
    %v760 = vunpack.c.h.b16 %v60
    %v761 = vunpack.c.l.b16 %v61
    %v762 = vunpack.c.h.b16 %v61
    %v763 = vunpack.c.l.b16 %v62
    %v764 = vunpack.c.h.b16 %v62
    %v765 = vunpack.c.l.b16 %v63
    %v766 = vunpack.c.h.b16 %v63
    %v767 = vunpack.c.l.b16 %v64
    %v768 = vunpack.c.h.b16 %v64
    %v769 = vunpack.c.l.b16 %v65
    %v770 = vunpack.c.h.b16 %v65
    %v771 = vunpack.c.l.b16 %v66
    %v772 = vunpack.c.h.b16 %v66
    %v773 = vunpack.c.l.b16 %v67
    %v774 = vunpack.c.h.b16 %v67
    %v775 = vunpack.c.l.b16 %v68
    %v776 = vunpack.c.h.b16 %v68
    %v777 = vunpack.c.l.b16 %v69
    %v778 = vunpack.c.h.b16 %v69
    %v779 = vunpack.c.l.b16 %v70
    %v780 = vunpack.c.h.b16 %v70
    %v781 = vunpack.c.l.b16 %v71
    %v782 = vunpack.c.h.b16 %v71
    %v783 = vunpack.c.l.b16 %v72
    %v784 = vunpack.c.h.b16 %v72
    %v785 = vunpack.c.l.b16 %v73
    %v786 = vunpack.c.h.b16 %v73
    %v787 = vunpack.c.l.b16 %v74
    %v788 = vunpack.c.h.b16 %v74
    %v789 = vunpack.c.l.b16 %v75
    %v790 = vunpack.c.h.b16 %v75
    %v791 = vunpack.c.l.b16 %v76
    %v792 = vunpack.c.h.b16 %v76
    %v793 = vunpack.c.l.b16 %v77
    %v794 = vunpack.c.h.b16 %v77
    %v795 = vunpack.c.l.b16 %v78
    %v796 = vunpack.c.h.b16 %v78
    %v797 = vunpack.c.l.b16 %v79
    %v798 = vunpack.c.h.b16 %v79
    %v799 = vunpack.c.l.b16 %v80
    %v800 = vunpack.c.h.b16 %v80
    %v801 = vunpack.c.l.b16 %v81
    %v802 = vunpack.c.h.b16 %v81
    %v803 = vunpack.c.l.b16 %v82
    %v804 = vunpack.c.h.b16 %v82
    %v805 = vunpack.c.l.b16 %v83
    %v806 = vunpack.c.h.b16 %v83
    %v807 = vunpack.c.l.b16 %v84
    %v808 = vunpack.c.h.b16 %v84
    %v809 = vunpack.c.l.b16 %v85
    %v810 = vunpack.c.h.b16 %v85
    %v811 = vunpack.c.l.b16 %v86
    %v812 = vunpack.c.h.b16 %v86
    %v813 = vunpack.c.l.b16 %v87
    %v814 = vunpack.c.h.b16 %v87
    %v815 = vunpack.c.l.b16 %v88
    %v816 = vunpack.c.h.b16 %v88
    %v817 = vunpack.c.l.b16 %v89
    %v818 = vunpack.c.h.b16 %v89
    %v819 = vunpack.c.l.b16 %v90
    %v820 = vunpack.c.h.b16 %v90
    %v821 = vunpack.c.l.b16 %v91
    %v822 = vunpack.c.h.b16 %v91
    %v823 = vunpack.c.l.b16 %v92
    %v824 = vunpack.c.h.b16 %v92
    %v825 = vunpack.c.l.b16 %v93
    %v826 = vunpack.c.h.b16 %v93
    %v827 = vunpack.c.l.b16 %v94
    %v828 = vunpack.c.h.b16 %v94
    %v829 = vunpack.c.l.b16 %v95
    %v830 = vunpack.c.h.b16 %v95
    %v831 = vunpack.c.l.b16 %v96
    %v832 = vunpack.c.h.b16 %v96
    %v833 = vunpack.c.l.b16 %v97
    %v834 = vunpack.c.h.b16 %v97
    %v835 = vunpack.c.l.b16 %v98
    %v836 = vunpack.c.h.b16 %v98
    %v837 = vunpack.c.l.b16 %v99
    %v838 = vunpack.c.h.b16 %v99
    %v839 = vunpack.c.l.b16 %v100
    %v840 = vunpack.c.h.b16 %v100
    %v841 = vunpack.c.l.b16 %v101
    %v842 = vunpack.c.h.b16 %v101
    %v843 = vunpack.c.l.b16 %v102
    %v844 = vunpack.c.h.b16 %v102
    %v845 = vunpack.c.l.b16 %v103
    %v846 = vunpack.c.h.b16 %v103
    %v847 = vunpack.c.l.b16 %v104
    %v848 = vunpack.c.h.b16 %v104
    %v849 = vunpack.c.l.b16 %v105
    %v850 = vunpack.c.h.b16 %v105
    %v851 = vunpack.c.l.b16 %v106
    %v852 = vunpack.c.h.b16 %v106
    %v853 = vunpack.c.l.b16 %v107
    %v854 = vunpack.c.h.b16 %v107
    %v855 = vunpack.c.l.b16 %v108
    %v856 = vunpack.c.h.b16 %v108
    %v857 = vunpack.c.l.b16 %v109
    %v858 = vunpack.c.h.b16 %v109
    %v859 = vunpack.c.l.b16 %v110
    %v860 = vunpack.c.h.b16 %v110
    %v861 = vunpack.c.l.b16 %v111
    %v862 = vunpack.c.h.b16 %v111
    %v863 = vunpack.c.l.b16 %v112
    %v864 = vunpack.c.h.b16 %v112
    %v865 = vunpack.c.l.b16 %v113
    %v866 = vunpack.c.h.b16 %v113
    %v867 = vunpack.c.l.b16 %v114
    %v868 = vunpack.c.h.b16 %v114
    %v869 = vunpack.c.l.b16 %v115
    %v870 = vunpack.c.h.b16 %v115
    %v871 = vunpack.c.l.b16 %v116
    %v872 = vunpack.c.h.b16 %v116
    %v873 = vunpack.c.l.b16 %v117
    %v874 = vunpack.c.h.b16 %v117
    %v875 = vunpack.c.l.b16 %v118
    %v876 = vunpack.c.h.b16 %v118
    %v877 = vunpack.c.l.b16 %v119
    %v878 = vunpack.c.h.b16 %v119
    %v879 = vunpack.c.l.b16 %v120
    %v880 = vunpack.c.h.b16 %v120
    %v881 = vunpack.c.l.b16 %v121
    %v882 = vunpack.c.h.b16 %v121
    %v883 = vunpack.c.l.b16 %v122
    %v884 = vunpack.c.h.b16 %v122
    %v885 = vunpack.c.l.b16 %v123
    %v886 = vunpack.c.h.b16 %v123
    %v887 = vunpack.c.l.b16 %v124
    %v888 = vunpack.c.h.b16 %v124
    %v889 = vunpack.c.l.b16 %v125
    %v890 = vunpack.c.h.b16 %v125
    %v891 = vunpack.c.l.b16 %v126
    %v892 = vunpack.c.h.b16 %v126
    %v893 = vunpack.c.l.b16 %v127
    %v894 = vunpack.c.h.b16 %v127
    %v895 = vunpack.c.l.b16 %v128
    %v896 = vunpack.c.h.b16 %v128
    %v897 = vunpack.c.l.b16 %v129
    %v898 = vunpack.c.h.b16 %v129
    %v899 = vunpack.c.l.b16 %v130
    %v900 = vunpack.c.h.b16 %v130
    %v901 = vunpack.c.l.b16 %v131
    %v902 = vunpack.c.h.b16 %v131
    %v903 = vunpack.c.l.b16 %v132
    %v904 = vunpack.c.h.b16 %v132
    %v905 = vunpack.c.l.b16 %v133
    %v906 = vunpack.c.h.b16 %v133
    %v907 = vunpack.c.l.b16 %v134
    %v908 = vunpack.c.h.b16 %v134
    %v909 = vunpack.c.l.b16 %v135
    %v910 = vunpack.c.h.b16 %v135
    %v911 = vunpack.c.l.b16 %v136
    %v912 = vunpack.c.h.b16 %v136
    %v913 = vunpack.c.l.b16 %v137
    %v914 = vunpack.c.h.b16 %v137
    %v915 = vunpack.c.l.b16 %v138
    %v916 = vunpack.c.h.b16 %v138
    %v917 = vunpack.c.l.b16 %v139
    %v918 = vunpack.c.h.b16 %v139
    %v919 = vunpack.c.l.b16 %v140
    %v920 = vunpack.c.h.b16 %v140
    %v921 = vunpack.c.l.b16 %v141
    %v922 = vunpack.c.h.b16 %v141
    %v923 = vunpack.c.l.b16 %v142
    %v924 = vunpack.c.h.b16 %v142
    %v925 = vunpack.c.l.b16 %v143
    %v926 = vunpack.c.h.b16 %v143
    %v927 = vunpack.c.l.b16 %v144
    %v928 = vunpack.c.h.b16 %v144
    %v929 = vunpack.c.l.b16 %v145
    %v930 = vunpack.c.h.b16 %v145
    %v931 = vunpack.c.l.b16 %v146
    %v932 = vunpack.c.h.b16 %v146
    %v933 = vunpack.c.l.b16 %v147
    %v934 = vunpack.c.h.b16 %v147
    %v935 = vunpack.c.l.b16 %v148
    %v936 = vunpack.c.h.b16 %v148
    %v937 = vunpack.c.l.b16 %v149
    %v938 = vunpack.c.h.b16 %v149
    %v939 = vunpack.c.l.b16 %v150
    %v940 = vunpack.c.h.b16 %v150
    %v941 = vunpack.c.l.b16 %v151
    %v942 = vunpack.c.h.b16 %v151
    %v943 = vunpack.c.l.b16 %v152
    %v944 = vunpack.c.h.b16 %v152
    %v945 = vunpack.c.l.b16 %v153
    %v946 = vunpack.c.h.b16 %v153
    %v947 = vunpack.c.l.b16 %v154
    %v948 = vunpack.c.h.b16 %v154
    %v949 = vunpack.c.l.b16 %v155
    %v950 = vunpack.c.h.b16 %v155
    %v951 = vunpack.c.l.b16 %v156
    %v952 = vunpack.c.h.b16 %v156
    %v953 = vunpack.c.l.b16 %v157
    %v954 = vunpack.c.h.b16 %v157
    %v955 = vunpack.c.l.b16 %v158
    %v956 = vunpack.c.h.b16 %v158
    %v957 = vunpack.c.l.b16 %v159
    %v958 = vunpack.c.h.b16 %v159
    %v959 = vunpack.c.l.b16 %v160
    %v960 = vunpack.c.h.b16 %v160
    %v961 = vunpack.c.l.b16 %v161
    %v962 = vunpack.c.h.b16 %v161
    %v963 = vunpack.c.l.b16 %v162
    %v964 = vunpack.c.h.b16 %v162
    %v965 = vunpack.c.l.b16 %v163
    %v966 = vunpack.c.h.b16 %v163
    %v967 = vunpack.c.l.b16 %v164
    %v968 = vunpack.c.h.b16 %v164
    %v969 = vunpack.c.l.b16 %v165
    %v970 = vunpack.c.h.b16 %v165
    %v971 = vunpack.c.l.b16 %v166
    %v972 = vunpack.c.h.b16 %v166
    %v973 = vunpack.c.l.b16 %v167
    %v974 = vunpack.c.h.b16 %v167
    %v975 = vunpack.c.l.b16 %v168
    %v976 = vunpack.c.h.b16 %v168
    %v977 = vunpack.c.l.b16 %v169
    %v978 = vunpack.c.h.b16 %v169
    %v979 = vunpack.c.l.b16 %v170
    %v980 = vunpack.c.h.b16 %v170
    %v981 = vunpack.c.l.b16 %v171
    %v982 = vunpack.c.h.b16 %v171
    %v983 = vunpack.c.l.b16 %v172
    %v984 = vunpack.c.h.b16 %v172
    %v985 = vunpack.c.l.b16 %v173
    %v986 = vunpack.c.h.b16 %v173
    %v987 = vunpack.c.l.b16 %v174
    %v988 = vunpack.c.h.b16 %v174
    %v989 = vunpack.c.l.b16 %v175
    %v990 = vunpack.c.h.b16 %v175
    %v991 = vunpack.c.l.b16 %v176
    %v992 = vunpack.c.h.b16 %v176
    %v993 = vunpack.c.l.b16 %v177
    %v994 = vunpack.c.h.b16 %v177
    %v995 = vunpack.c.l.b16 %v178
    %v996 = vunpack.c.h.b16 %v178
    %v997 = vunpack.c.l.b16 %v179
    %v998 = vunpack.c.h.b16 %v179
    %v999 = vunpack.c.l.b16 %v180
    %v1000 = vunpack.c.h.b16 %v180
    %v1001 = vunpack.c.l.b16 %v181
    %v1002 = vunpack.c.h.b16 %v181
    %v1003 = vunpack.c.l.b16 %v182
    %v1004 = vunpack.c.h.b16 %v182
    %v1005 = vunpack.c.l.b16 %v183
    %v1006 = vunpack.c.h.b16 %v183
    %v1007 = vunpack.c.l.b16 %v184
    %v1008 = vunpack.c.h.b16 %v184
    %v1009 = vunpack.c.l.b16 %v185
    %v1010 = vunpack.c.h.b16 %v185
    %v1011 = vunpack.c.l.b16 %v186
    %v1012 = vunpack.c.h.b16 %v186
    %v1013 = vunpack.c.l.b16 %v187
    %v1014 = vunpack.c.h.b16 %v187
    %v1015 = vunpack.c.l.b16 %v188
    %v1016 = vunpack.c.h.b16 %v188
    %v1017 = vunpack.c.l.b16 %v189
    %v1018 = vunpack.c.h.b16 %v189
    %v1019 = vunpack.c.l.b16 %v190
    %v1020 = vunpack.c.h.b16 %v190
    %v1021 = vunpack.c.l.b16 %v191
    %v1022 = vunpack.c.h.b16 %v191
    %v1023 = vunpack.c.l.b16 %v192
    %v1024 = vunpack.c.h.b16 %v192
    %v1025 = vunpack.c.l.b16 %v193
    %v1026 = vunpack.c.h.b16 %v193
    %v1027 = vunpack.c.l.b16 %v194
    %v1028 = vunpack.c.h.b16 %v194
    %v1029 = vunpack.c.l.b16 %v195
    %v1030 = vunpack.c.h.b16 %v195
    %v1031 = vunpack.c.l.b16 %v196
    %v1032 = vunpack.c.h.b16 %v196
    %v1033 = vunpack.c.l.b16 %v197
    %v1034 = vunpack.c.h.b16 %v197
    %v1035 = vunpack.c.l.b16 %v198
    %v1036 = vunpack.c.h.b16 %v198
    %v1037 = vunpack.c.l.b16 %v199
    %v1038 = vunpack.c.h.b16 %v199
    %v1039 = vunpack.c.l.b16 %v200
    %v1040 = vunpack.c.h.b16 %v200
    %v1041 = vunpack.c.l.b16 %v201
    %v1042 = vunpack.c.h.b16 %v201
    %v1043 = vunpack.c.l.b16 %v202
    %v1044 = vunpack.c.h.b16 %v202
    %v1045 = vunpack.c.l.b16 %v203
    %v1046 = vunpack.c.h.b16 %v203
    %v1047 = vunpack.c.l.b16 %v204
    %v1048 = vunpack.c.h.b16 %v204
    %v1049 = vunpack.c.l.b16 %v205
    %v1050 = vunpack.c.h.b16 %v205
    %v1051 = vunpack.c.l.b16 %v206
    %v1052 = vunpack.c.h.b16 %v206
    %v1053 = vunpack.c.l.b16 %v207
    %v1054 = vunpack.c.h.b16 %v207
    %v1055 = vunpack.c.l.b16 %v208
    %v1056 = vunpack.c.h.b16 %v208
    %v1057 = vunpack.c.l.b16 %v209
    %v1058 = vunpack.c.h.b16 %v209
    %v1059 = vunpack.c.l.b16 %v210
    %v1060 = vunpack.c.h.b16 %v210
    %v1061 = vunpack.c.l.b16 %v211
    %v1062 = vunpack.c.h.b16 %v211
    %v1063 = vunpack.c.l.b16 %v212
    %v1064 = vunpack.c.h.b16 %v212
    %v1065 = vunpack.c.l.b16 %v213
    %v1066 = vunpack.c.h.b16 %v213
    %v1067 = vunpack.c.l.b16 %v214
    %v1068 = vunpack.c.h.b16 %v214
    %v1069 = vunpack.c.l.b16 %v215
    %v1070 = vunpack.c.h.b16 %v215
    %v1071 = vunpack.c.l.b16 %v216
    %v1072 = vunpack.c.h.b16 %v216
    %v1073 = vunpack.c.l.b16 %v217
    %v1074 = vunpack.c.h.b16 %v217
    %v1075 = vunpack.c.l.b16 %v218
    %v1076 = vunpack.c.h.b16 %v218
    %v1077 = vunpack.c.l.b16 %v219
    %v1078 = vunpack.c.h.b16 %v219
    %v1079 = vunpack.c.l.b16 %v220
    %v1080 = vunpack.c.h.b16 %v220
    %v1081 = vunpack.c.l.b16 %v221
    %v1082 = vunpack.c.h.b16 %v221
    %v1083 = vunpack.c.l.b16 %v222
    %v1084 = vunpack.c.h.b16 %v222
    %v1085 = vunpack.c.l.b16 %v223
    %v1086 = vunpack.c.h.b16 %v223
    %v1087 = vunpack.c.l.b16 %v224
    %v1088 = vunpack.c.h.b16 %v224
    %v1089 = vunpack.c.l.b16 %v225
    %v1090 = vunpack.c.h.b16 %v225
    %v1091 = vunpack.c.l.b16 %v226
    %v1092 = vunpack.c.h.b16 %v226
    %v1093 = vunpack.c.l.b16 %v227
    %v1094 = vunpack.c.h.b16 %v227
    %v1095 = vunpack.c.l.b16 %v228
    %v1096 = vunpack.c.h.b16 %v228
    %v1097 = vunpack.c.l.b16 %v229
    %v1098 = vunpack.c.h.b16 %v229
    %v1099 = vunpack.c.l.b16 %v230
    %v1100 = vunpack.c.h.b16 %v230
    %v1101 = vunpack.c.l.b16 %v231
    %v1102 = vunpack.c.h.b16 %v231
    %v1103 = vunpack.c.l.b16 %v232
    %v1104 = vunpack.c.h.b16 %v232
    %v1105 = vunpack.c.l.b16 %v233
    %v1106 = vunpack.c.h.b16 %v233
    %v1107 = vunpack.c.l.b16 %v234
    %v1108 = vunpack.c.h.b16 %v234
    %v1109 = vunpack.c.l.b16 %v235
    %v1110 = vunpack.c.h.b16 %v235
    %v1111 = vunpack.c.l.b16 %v236
    %v1112 = vunpack.c.h.b16 %v236
    %v1113 = vunpack.c.l.b16 %v237
    %v1114 = vunpack.c.h.b16 %v237
    %v1115 = vunpack.c.l.b16 %v238
    %v1116 = vunpack.c.h.b16 %v238
    %v1117 = vunpack.c.l.b16 %v239
    %v1118 = vunpack.c.h.b16 %v239
    %v1119 = vunpack.c.l.b16 %v240
    %v1120 = vunpack.c.h.b16 %v240
    %v1121 = vunpack.c.l.b16 %v241
    %v1122 = vunpack.c.h.b16 %v241
    %v1123 = vunpack.c.l.b16 %v242
    %v1124 = vunpack.c.h.b16 %v242
    %v1125 = vunpack.c.l.b16 %v243
    %v1126 = vunpack.c.h.b16 %v243
    %v1127 = vunpack.c.l.b16 %v244
    %v1128 = vunpack.c.h.b16 %v244
    %v1129 = vunpack.c.l.b16 %v245
    %v1130 = vunpack.c.h.b16 %v245
    %v1131 = vunpack.c.l.b16 %v246
    %v1132 = vunpack.c.h.b16 %v246
    %v1133 = vunpack.c.l.b16 %v247
    %v1134 = vunpack.c.h.b16 %v247
    %v1135 = vunpack.c.l.b16 %v248
    %v1136 = vunpack.c.h.b16 %v248
    %v1137 = vunpack.c.l.b16 %v249
    %v1138 = vunpack.c.h.b16 %v249
    %v1139 = vunpack.c.l.b16 %v250
    %v1140 = vunpack.c.h.b16 %v250
    %v1141 = vunpack.c.l.b16 %v251
    %v1142 = vunpack.c.h.b16 %v251
    %v1143 = vunpack.c.l.b16 %v252
    %v1144 = vunpack.c.h.b16 %v252
    %v1145 = vunpack.c.l.b16 %v253
    %v1146 = vunpack.c.h.b16 %v253
    %v1147 = vunpack.c.l.b16 %v254
    %v1148 = vunpack.c.h.b16 %v254
    %v1149 = vunpack.c.l.b16 %v255
    %v1150 = vunpack.c.h.b16 %v255
    %v1151 = vunpack.c.l.b16 %v256
    %v1152 = vunpack.c.h.b16 %v256
    %v1153 = vunpack.c.l.b16 %v257
    %v1154 = vunpack.c.h.b16 %v257
    %v1155 = vunpack.c.l.b16 %v258
    %v1156 = vunpack.c.h.b16 %v258
    %v1157 = vunpack.c.l.b16 %v259
    %v1158 = vunpack.c.h.b16 %v259
    %v1159 = vunpack.c.l.b16 %v260
    %v1160 = vunpack.c.h.b16 %v260
    %v1161 = vunpack.c.l.b16 %v261
    %v1162 = vunpack.c.h.b16 %v261
    %v1163 = vunpack.c.l.b16 %v262
    %v1164 = vunpack.c.h.b16 %v262
    %v1165 = vunpack.c.l.b16 %v263
    %v1166 = vunpack.c.h.b16 %v263
    %v1167 = vunpack.c.l.b16 %v264
    %v1168 = vunpack.c.h.b16 %v264
    %v1169 = vunpack.c.l.b16 %v265
    %v1170 = vunpack.c.h.b16 %v265
    %v1171 = vunpack.c.l.b16 %v266
    %v1172 = vunpack.c.h.b16 %v266
    %v1173 = vunpack.c.l.b16 %v267
    %v1174 = vunpack.c.h.b16 %v267
    %v1175 = vunpack.c.l.b16 %v268
    %v1176 = vunpack.c.h.b16 %v268
    %v1177 = vunpack.c.l.b16 %v269
    %v1178 = vunpack.c.h.b16 %v269
    %v1179 = vunpack.c.l.b16 %v270
    %v1180 = vunpack.c.h.b16 %v270
    %v1181 = vunpack.c.l.b16 %v271
    %v1182 = vunpack.c.h.b16 %v271
    %v1183 = vunpack.c.l.b16 %v272
    %v1184 = vunpack.c.h.b16 %v272
    %v1185 = vunpack.c.l.b16 %v273
    %v1186 = vunpack.c.h.b16 %v273
    %v1187 = vunpack.c.l.b16 %v274
    %v1188 = vunpack.c.h.b16 %v274
    %v1189 = vunpack.c.l.b16 %v275
    %v1190 = vunpack.c.h.b16 %v275
    %v1191 = vunpack.c.l.b16 %v276
    %v1192 = vunpack.c.h.b16 %v276
    %v1193 = vunpack.c.l.b16 %v277
    %v1194 = vunpack.c.h.b16 %v277
    %v1195 = vunpack.c.l.b16 %v278
    %v1196 = vunpack.c.h.b16 %v278
    %v1197 = vunpack.c.l.b16 %v279
    %v1198 = vunpack.c.h.b16 %v279
    %v1199 = vunpack.c.l.b16 %v280
    %v1200 = vunpack.c.h.b16 %v280
    %v1201 = vunpack.c.l.b16 %v281
    %v1202 = vunpack.c.h.b16 %v281
    %v1203 = vunpack.c.l.b16 %v282
    %v1204 = vunpack.c.h.b16 %v282
    %v1205 = vunpack.c.l.b16 %v283
    %v1206 = vunpack.c.h.b16 %v283
    %v1207 = vunpack.c.l.b16 %v284
    %v1208 = vunpack.c.h.b16 %v284
    %v1209 = vunpack.c.l.b16 %v285
    %v1210 = vunpack.c.h.b16 %v285
    %v1211 = vunpack.c.l.b16 %v286
    %v1212 = vunpack.c.h.b16 %v286
    %v1213 = vunpack.c.l.b16 %v287
    %v1214 = vunpack.c.h.b16 %v287
    %v1215 = vunpack.c.l.b16 %v288
    %v1216 = vunpack.c.h.b16 %v288
    %v1217 = vunpack.c.l.b16 %v289
    %v1218 = vunpack.c.h.b16 %v289
    %v1219 = vunpack.c.l.b16 %v290
    %v1220 = vunpack.c.h.b16 %v290
    %v1221 = vunpack.c.l.b16 %v291
    %v1222 = vunpack.c.h.b16 %v291
    %v1223 = vunpack.c.l.b16 %v292
    %v1224 = vunpack.c.h.b16 %v292
    %v1225 = vunpack.c.l.b16 %v293
    %v1226 = vunpack.c.h.b16 %v293
    %v1227 = vunpack.c.l.b16 %v294
    %v1228 = vunpack.c.h.b16 %v294
    %v1229 = vunpack.c.l.b16 %v295
    %v1230 = vunpack.c.h.b16 %v295
    %v1231 = vunpack.c.l.b16 %v296
    %v1232 = vunpack.c.h.b16 %v296
    %v1233 = vunpack.c.l.b16 %v297
    %v1234 = vunpack.c.h.b16 %v297
    %v1235 = vunpack.c.l.b16 %v298
    %v1236 = vunpack.c.h.b16 %v298
    %v1237 = vunpack.c.l.b16 %v299
    %v1238 = vunpack.c.h.b16 %v299
    %v1239 = vunpack.c.l.b16 %v300
    %v1240 = vunpack.c.h.b16 %v300
    %v1241 = vunpack.c.l.b16 %v301
    %v1242 = vunpack.c.h.b16 %v301
    %v1243 = vunpack.c.l.b16 %v302
    %v1244 = vunpack.c.h.b16 %v302
    %v1245 = vunpack.c.l.b16 %v303
    %v1246 = vunpack.c.h.b16 %v303
    %v1247 = vunpack.c.l.b16 %v304
    %v1248 = vunpack.c.h.b16 %v304
    %v1249 = vunpack.c.l.b16 %v305
    %v1250 = vunpack.c.h.b16 %v305
    %v1251 = vunpack.c.l.b16 %v306
    %v1252 = vunpack.c.h.b16 %v306
    %v1253 = vunpack.c.l.b16 %v307
    %v1254 = vunpack.c.h.b16 %v307
    %v1255 = vunpack.c.l.b16 %v308
    %v1256 = vunpack.c.h.b16 %v308
    %v1257 = vunpack.c.l.b16 %v309
    %v1258 = vunpack.c.h.b16 %v309
    %v1259 = vunpack.c.l.b16 %v310
    %v1260 = vunpack.c.h.b16 %v310
    %v1261 = vunpack.c.l.b16 %v311
    %v1262 = vunpack.c.h.b16 %v311
    %v1263 = vunpack.c.l.b16 %v312
    %v1264 = vunpack.c.h.b16 %v312
    %v1265 = vunpack.c.l.b16 %v313
    %v1266 = vunpack.c.h.b16 %v313
    %v1267 = vunpack.c.l.b16 %v314
    %v1268 = vunpack.c.h.b16 %v314
    %v1269 = vunpack.c.l.b16 %v315
    %v1270 = vunpack.c.h.b16 %v315
    %v1271 = vunpack.c.l.b16 %v316
    %v1272 = vunpack.c.h.b16 %v316
    %v1273 = vunpack.c.l.b16 %v317
    %v1274 = vunpack.c.h.b16 %v317
    %v1275 = vunpack.c.l.b16 %v318
    %v1276 = vunpack.c.h.b16 %v318
    %v1277 = vunpack.c.l.b16 %v319
    %v1278 = vunpack.c.h.b16 %v319
    %v1279 = vunpack.c.l.b16 %v320
    %v1280 = vunpack.c.h.b16 %v320
    %v1281 = vunpack.c.l.b16 %v321
    %v1282 = vunpack.c.h.b16 %v321
    %v1283 = vunpack.c.l.b16 %v322
    %v1284 = vunpack.c.h.b16 %v322
    %v1285 = vunpack.c.l.b16 %v323
    %v1286 = vunpack.c.h.b16 %v323
    %v1287 = vunpack.c.l.b16 %v324
    %v1288 = vunpack.c.h.b16 %v324
    %v1289 = vunpack.c.l.b16 %v325
    %v1290 = vunpack.c.h.b16 %v325
    %v1291 = vunpack.c.l.b16 %v326
    %v1292 = vunpack.c.h.b16 %v326
    %v1293 = vunpack.c.l.b16 %v327
    %v1294 = vunpack.c.h.b16 %v327
    %v1295 = vunpack.c.l.b16 %v328
    %v1296 = vunpack.c.h.b16 %v328
    %v1297 = vunpack.c.l.b16 %v329
    %v1298 = vunpack.c.h.b16 %v329
    %v1299 = vunpack.c.l.b16 %v330
    %v1300 = vunpack.c.h.b16 %v330
    %v1301 = vunpack.c.l.b16 %v331
    %v1302 = vunpack.c.h.b16 %v331
    %v1303 = vunpack.c.l.b16 %v332
    %v1304 = vunpack.c.h.b16 %v332
    %v1305 = vunpack.c.l.b16 %v333
    %v1306 = vunpack.c.h.b16 %v333
    %v1307 = vunpack.c.l.b16 %v334
    %v1308 = vunpack.c.h.b16 %v334
    %v1309 = vunpack.c.l.b16 %v335
    %v1310 = vunpack.c.h.b16 %v335
    %v1311 = vunpack.c.l.b16 %v336
    %v1312 = vunpack.c.h.b16 %v336
    %v1313 = vunpack.c.l.b16 %v337
    %v1314 = vunpack.c.h.b16 %v337
    %v1315 = vunpack.c.l.b16 %v338
    %v1316 = vunpack.c.h.b16 %v338
    %v1317 = vunpack.c.l.b16 %v339
    %v1318 = vunpack.c.h.b16 %v339
    %v1319 = vunpack.c.l.b16 %v340
    %v1320 = vunpack.c.h.b16 %v340
    %v1321 = vunpack.c.l.b16 %v341
    %v1322 = vunpack.c.h.b16 %v341
    %v1323 = vunpack.c.l.b16 %v342
    %v1324 = vunpack.c.h.b16 %v342
    %v1325 = vunpack.c.l.b16 %v343
    %v1326 = vunpack.c.h.b16 %v343
    %v1327 = vunpack.c.l.b16 %v344
    %v1328 = vunpack.c.h.b16 %v344
    %v1329 = vunpack.c.l.b16 %v345
    %v1330 = vunpack.c.h.b16 %v345
    %v1331 = vunpack.c.l.b16 %v346
    %v1332 = vunpack.c.h.b16 %v346
    %v1333 = vunpack.c.l.b16 %v347
    %v1334 = vunpack.c.h.b16 %v347
    %v1335 = vunpack.c.l.b16 %v348
    %v1336 = vunpack.c.h.b16 %v348
    %v1337 = vunpack.c.l.b16 %v349
    %v1338 = vunpack.c.h.b16 %v349
    %v1339 = vunpack.c.l.b16 %v350
    %v1340 = vunpack.c.h.b16 %v350
    %v1341 = vunpack.c.l.b16 %v351
    %v1342 = vunpack.c.h.b16 %v351
    %v1343 = vunpack.c.l.b16 %v352
    %v1344 = vunpack.c.h.b16 %v352
    %v1345 = vunpack.c.l.b16 %v353
    %v1346 = vunpack.c.h.b16 %v353
    %v1347 = vunpack.c.l.b16 %v354
    %v1348 = vunpack.c.h.b16 %v354
    %v1349 = vunpack.c.l.b16 %v355
    %v1350 = vunpack.c.h.b16 %v355
    %v1351 = vunpack.c.l.b16 %v356
    %v1352 = vunpack.c.h.b16 %v356
    %v1353 = vunpack.c.l.b16 %v357
    %v1354 = vunpack.c.h.b16 %v357
    %v1355 = vunpack.c.l.b16 %v358
    %v1356 = vunpack.c.h.b16 %v358
    %v1357 = vunpack.c.l.b16 %v359
    %v1358 = vunpack.c.h.b16 %v359
    %v1359 = vunpack.c.l.b16 %v360
    %v1360 = vunpack.c.h.b16 %v360
    %v1361 = vunpack.c.l.b16 %v361
    %v1362 = vunpack.c.h.b16 %v361
    %v1363 = vunpack.c.l.b16 %v362
    %v1364 = vunpack.c.h.b16 %v362
    %v1365 = vunpack.c.l.b16 %v363
    %v1366 = vunpack.c.h.b16 %v363
    %v1367 = vunpack.c.l.b16 %v364
    %v1368 = vunpack.c.h.b16 %v364
    %v1369 = vunpack.c.l.b16 %v365
    %v1370 = vunpack.c.h.b16 %v365
    %v1371 = vunpack.c.l.b16 %v366
    %v1372 = vunpack.c.h.b16 %v366
    %v1373 = vunpack.c.l.b16 %v367
    %v1374 = vunpack.c.h.b16 %v367
    %v1375 = vunpack.c.l.b16 %v368
    %v1376 = vunpack.c.h.b16 %v368
    %v1377 = vunpack.c.l.b16 %v369
    %v1378 = vunpack.c.h.b16 %v369
    %v1379 = vunpack.c.l.b16 %v370
    %v1380 = vunpack.c.h.b16 %v370
    %v1381 = vunpack.c.l.b16 %v371
    %v1382 = vunpack.c.h.b16 %v371
    %v1383 = vunpack.c.l.b16 %v372
    %v1384 = vunpack.c.h.b16 %v372
    %v1385 = vunpack.c.l.b16 %v373
    %v1386 = vunpack.c.h.b16 %v373
    %v1387 = vunpack.c.l.b16 %v374
    %v1388 = vunpack.c.h.b16 %v374
    %v1389 = vunpack.c.l.b16 %v375
    %v1390 = vunpack.c.h.b16 %v375
    %v1391 = vunpack.c.l.b16 %v376
    %v1392 = vunpack.c.h.b16 %v376
    %v1393 = vunpack.c.l.b16 %v377
    %v1394 = vunpack.c.h.b16 %v377
    %v1395 = vunpack.c.l.b16 %v378
    %v1396 = vunpack.c.h.b16 %v378
    %v1397 = vunpack.c.l.b16 %v379
    %v1398 = vunpack.c.h.b16 %v379
    %v1399 = vunpack.c.l.b16 %v380
    %v1400 = vunpack.c.h.b16 %v380
    %v1401 = vunpack.c.l.b16 %v381
    %v1402 = vunpack.c.h.b16 %v381
    %v1403 = vunpack.c.l.b16 %v382
    %v1404 = vunpack.c.h.b16 %v382
    %v1405 = vunpack.c.l.b16 %v383
    %v1406 = vunpack.c.h.b16 %v383
    %v1407 = vunpack.c.l.b16 %v384
    %v1408 = vunpack.c.h.b16 %v384
    %v1409 = vunpack.c.l.b16 %v385
    %v1410 = vunpack.c.h.b16 %v385
    %v1411 = vunpack.c.l.b16 %v386
    %v1412 = vunpack.c.h.b16 %v386
    %v1413 = vunpack.c.l.b16 %v387
    %v1414 = vunpack.c.h.b16 %v387
    %v1415 = vunpack.c.l.b16 %v388
    %v1416 = vunpack.c.h.b16 %v388
    %v1417 = vunpack.c.l.b16 %v389
    %v1418 = vunpack.c.h.b16 %v389
    %v1419 = vunpack.c.l.b16 %v390
    %v1420 = vunpack.c.h.b16 %v390
    %v1421 = vunpack.c.l.b16 %v391
    %v1422 = vunpack.c.h.b16 %v391
    %v1423 = vunpack.c.l.b16 %v392
    %v1424 = vunpack.c.h.b16 %v392
    %v1425 = vpack.c.b16 %v777, %v753
    %v1426 = vpack.c.b16 %v778, %v754
    %v1427 = vpack.c.b16 %v779, %v755
    %v1428 = vpack.c.b16 %v780, %v756
    %v1429 = vpack.c.b16 %v781, %v757
    %v1430 = vpack.c.b16 %v782, %v758
    %v1431 = vpack.c.b16 %v783, %v759
    %v1432 = vpack.c.b16 %v784, %v760
    %v1433 = vpack.c.b16 %v785, %v761
    %v1434 = vpack.c.b16 %v786, %v762
    %v1435 = vpack.c.b16 %v787, %v763
    %v1436 = vpack.c.b16 %v788, %v764
    %v1437 = vpack.c.b16 %v789, %v765
    %v1438 = vpack.c.b16 %v790, %v766
    %v1439 = vpack.c.b16 %v791, %v767
    %v1440 = vpack.c.b16 %v792, %v768
    %v1441 = vpack.c.b16 %v793, %v769
    %v1442 = vpack.c.b16 %v794, %v770
    %v1443 = vpack.c.b16 %v795, %v771
    %v1444 = vpack.c.b16 %v796, %v772
    %v1445 = vpack.c.b16 %v797, %v773
    %v1446 = vpack.c.b16 %v798, %v774
    %v1447 = vpack.c.b16 %v799, %v775
    %v1448 = vpack.c.b16 %v800, %v776
    %v1449 = vpack.c.b16 %v825, %v801
    %v1450 = vpack.c.b16 %v826, %v802
    %v1451 = vpack.c.b16 %v827, %v803
    %v1452 = vpack.c.b16 %v828, %v804
    %v1453 = vpack.c.b16 %v829, %v805
    %v1454 = vpack.c.b16 %v830, %v806
    %v1455 = vpack.c.b16 %v831, %v807
    %v1456 = vpack.c.b16 %v832, %v808
    %v1457 = vpack.c.b16 %v833, %v809
    %v1458 = vpack.c.b16 %v834, %v810
    %v1459 = vpack.c.b16 %v835, %v811
    %v1460 = vpack.c.b16 %v836, %v812
    %v1461 = vpack.c.b16 %v837, %v813
    %v1462 = vpack.c.b16 %v838, %v814
    %v1463 = vpack.c.b16 %v839, %v815
    %v1464 = vpack.c.b16 %v840, %v816
    %v1465 = vpack.c.b16 %v841, %v817
    %v1466 = vpack.c.b16 %v842, %v818
    %v1467 = vpack.c.b16 %v843, %v819
    %v1468 = vpack.c.b16 %v844, %v820
    %v1469 = vpack.c.b16 %v845, %v821
    %v1470 = vpack.c.b16 %v846, %v822
    %v1471 = vpack.c.b16 %v847, %v823
    %v1472 = vpack.c.b16 %v848, %v824
    %v1473 = vpack.c.b16 %v873, %v849
    %v1474 = vpack.c.b16 %v874, %v850
    %v1475 = vpack.c.b16 %v875, %v851
    %v1476 = vpack.c.b16 %v876, %v852
    %v1477 = vpack.c.b16 %v877, %v853
    %v1478 = vpack.c.b16 %v878, %v854
    %v1479 = vpack.c.b16 %v879, %v855
    %v1480 = vpack.c.b16 %v880, %v856
    %v1481 = vpack.c.b16 %v881, %v857
    %v1482 = vpack.c.b16 %v882, %v858
    %v1483 = vpack.c.b16 %v883, %v859
    %v1484 = vpack.c.b16 %v884, %v860
    %v1485 = vpack.c.b16 %v885, %v861
    %v1486 = vpack.c.b16 %v886, %v862
    %v1487 = vpack.c.b16 %v887, %v863
    %v1488 = vpack.c.b16 %v888, %v864
    %v1489 = vpack.c.b16 %v889, %v865
    %v1490 = vpack.c.b16 %v890, %v866
    %v1491 = vpack.c.b16 %v891, %v867
    %v1492 = vpack.c.b16 %v892, %v868
    %v1493 = vpack.c.b16 %v893, %v869
    %v1494 = vpack.c.b16 %v894, %v870
    %v1495 = vpack.c.b16 %v895, %v871
    %v1496 = vpack.c.b16 %v896, %v872
    %v1497 = vpack.c.b16 %v921, %v897
    %v1498 = vpack.c.b16 %v922, %v898
    %v1499 = vpack.c.b16 %v923, %v899
    %v1500 = vpack.c.b16 %v924, %v900
    %v1501 = vpack.c.b16 %v925, %v901
    %v1502 = vpack.c.b16 %v926, %v902
    %v1503 = vpack.c.b16 %v927, %v903
    %v1504 = vpack.c.b16 %v928, %v904
    %v1505 = vpack.c.b16 %v929, %v905
    %v1506 = vpack.c.b16 %v930, %v906
    %v1507 = vpack.c.b16 %v931, %v907
    %v1508 = vpack.c.b16 %v932, %v908
    %v1509 = vpack.c.b16 %v933, %v909
    %v1510 = vpack.c.b16 %v934, %v910
    %v1511 = vpack.c.b16 %v935, %v911
    %v1512 = vpack.c.b16 %v936, %v912
    %v1513 = vpack.c.b16 %v937, %v913
    %v1514 = vpack.c.b16 %v938, %v914
    %v1515 = vpack.c.b16 %v939, %v915
    %v1516 = vpack.c.b16 %v940, %v916
    %v1517 = vpack.c.b16 %v941, %v917
    %v1518 = vpack.c.b16 %v942, %v918
    %v1519 = vpack.c.b16 %v943, %v919
    %v1520 = vpack.c.b16 %v944, %v920
    %v1521 = vpack.c.b16 %v969, %v945
    %v1522 = vpack.c.b16 %v970, %v946
    %v1523 = vpack.c.b16 %v971, %v947
    %v1524 = vpack.c.b16 %v972, %v948
    %v1525 = vpack.c.b16 %v973, %v949
    %v1526 = vpack.c.b16 %v974, %v950
    %v1527 = vpack.c.b16 %v975, %v951
    %v1528 = vpack.c.b16 %v976, %v952
    %v1529 = vpack.c.b16 %v977, %v953
    %v1530 = vpack.c.b16 %v978, %v954
    %v1531 = vpack.c.b16 %v979, %v955
    %v1532 = vpack.c.b16 %v980, %v956
    %v1533 = vpack.c.b16 %v981, %v957
    %v1534 = vpack.c.b16 %v982, %v958
    %v1535 = vpack.c.b16 %v983, %v959
    %v1536 = vpack.c.b16 %v984, %v960
    %v1537 = vpack.c.b16 %v985, %v961
    %v1538 = vpack.c.b16 %v986, %v962
    %v1539 = vpack.c.b16 %v987, %v963
    %v1540 = vpack.c.b16 %v988, %v964
    %v1541 = vpack.c.b16 %v989, %v965
    %v1542 = vpack.c.b16 %v990, %v966
    %v1543 = vpack.c.b16 %v991, %v967
    %v1544 = vpack.c.b16 %v992, %v968
    %v1545 = vpack.c.b16 %v1017, %v993
    %v1546 = vpack.c.b16 %v1018, %v994
    %v1547 = vpack.c.b16 %v1019, %v995
    %v1548 = vpack.c.b16 %v1020, %v996
    %v1549 = vpack.c.b16 %v1021, %v997
    %v1550 = vpack.c.b16 %v1022, %v998
    %v1551 = vpack.c.b16 %v1023, %v999
    %v1552 = vpack.c.b16 %v1024, %v1000
    %v1553 = vpack.c.b16 %v1025, %v1001
    %v1554 = vpack.c.b16 %v1026, %v1002
    %v1555 = vpack.c.b16 %v1027, %v1003
    %v1556 = vpack.c.b16 %v1028, %v1004
    %v1557 = vpack.c.b16 %v1029, %v1005
    %v1558 = vpack.c.b16 %v1030, %v1006
    %v1559 = vpack.c.b16 %v1031, %v1007
    %v1560 = vpack.c.b16 %v1032, %v1008
    %v1561 = vpack.c.b16 %v1033, %v1009
    %v1562 = vpack.c.b16 %v1034, %v1010
    %v1563 = vpack.c.b16 %v1035, %v1011
    %v1564 = vpack.c.b16 %v1036, %v1012
    %v1565 = vpack.c.b16 %v1037, %v1013
    %v1566 = vpack.c.b16 %v1038, %v1014
    %v1567 = vpack.c.b16 %v1039, %v1015
    %v1568 = vpack.c.b16 %v1040, %v1016
    %v1569 = vpack.c.b16 %v1065, %v1041
    %v1570 = vpack.c.b16 %v1066, %v1042
    %v1571 = vpack.c.b16 %v1067, %v1043
    %v1572 = vpack.c.b16 %v1068, %v1044
    %v1573 = vpack.c.b16 %v1069, %v1045
    %v1574 = vpack.c.b16 %v1070, %v1046
    %v1575 = vpack.c.b16 %v1071, %v1047
    %v1576 = vpack.c.b16 %v1072, %v1048
    %v1577 = vpack.c.b16 %v1073, %v1049
    %v1578 = vpack.c.b16 %v1074, %v1050
    %v1579 = vpack.c.b16 %v1075, %v1051
    %v1580 = vpack.c.b16 %v1076, %v1052
    %v1581 = vpack.c.b16 %v1077, %v1053
    %v1582 = vpack.c.b16 %v1078, %v1054
    %v1583 = vpack.c.b16 %v1079, %v1055
    %v1584 = vpack.c.b16 %v1080, %v1056
    %v1585 = vpack.c.b16 %v1081, %v1057
    %v1586 = vpack.c.b16 %v1082, %v1058
    %v1587 = vpack.c.b16 %v1083, %v1059
    %v1588 = vpack.c.b16 %v1084, %v1060
    %v1589 = vpack.c.b16 %v1085, %v1061
    %v1590 = vpack.c.b16 %v1086, %v1062
    %v1591 = vpack.c.b16 %v1087, %v1063
    %v1592 = vpack.c.b16 %v1088, %v1064
    %v1593 = vpack.c.b16 %v1113, %v1089
    %v1594 = vpack.c.b16 %v1114, %v1090
    %v1595 = vpack.c.b16 %v1115, %v1091
    %v1596 = vpack.c.b16 %v1116, %v1092
    %v1597 = vpack.c.b16 %v1117, %v1093
    %v1598 = vpack.c.b16 %v1118, %v1094
    %v1599 = vpack.c.b16 %v1119, %v1095
    %v1600 = vpack.c.b16 %v1120, %v1096
    %v1601 = vpack.c.b16 %v1121, %v1097
    %v1602 = vpack.c.b16 %v1122, %v1098
    %v1603 = vpack.c.b16 %v1123, %v1099
    %v1604 = vpack.c.b16 %v1124, %v1100
    %v1605 = vpack.c.b16 %v1125, %v1101
    %v1606 = vpack.c.b16 %v1126, %v1102
    %v1607 = vpack.c.b16 %v1127, %v1103
    %v1608 = vpack.c.b16 %v1128, %v1104
    %v1609 = vpack.c.b16 %v1129, %v1105
    %v1610 = vpack.c.b16 %v1130, %v1106
    %v1611 = vpack.c.b16 %v1131, %v1107
    %v1612 = vpack.c.b16 %v1132, %v1108
    %v1613 = vpack.c.b16 %v1133, %v1109
    %v1614 = vpack.c.b16 %v1134, %v1110
    %v1615 = vpack.c.b16 %v1135, %v1111
    %v1616 = vpack.c.b16 %v1136, %v1112
    %v1617 = vpack.c.b16 %v1161, %v1137
    %v1618 = vpack.c.b16 %v1162, %v1138
    %v1619 = vpack.c.b16 %v1163, %v1139
    %v1620 = vpack.c.b16 %v1164, %v1140
    %v1621 = vpack.c.b16 %v1165, %v1141
    %v1622 = vpack.c.b16 %v1166, %v1142
    %v1623 = vpack.c.b16 %v1167, %v1143
    %v1624 = vpack.c.b16 %v1168, %v1144
    %v1625 = vpack.c.b16 %v1169, %v1145
    %v1626 = vpack.c.b16 %v1170, %v1146
    %v1627 = vpack.c.b16 %v1171, %v1147
    %v1628 = vpack.c.b16 %v1172, %v1148
    %v1629 = vpack.c.b16 %v1173, %v1149
    %v1630 = vpack.c.b16 %v1174, %v1150
    %v1631 = vpack.c.b16 %v1175, %v1151
    %v1632 = vpack.c.b16 %v1176, %v1152
    %v1633 = vpack.c.b16 %v1177, %v1153
    %v1634 = vpack.c.b16 %v1178, %v1154
    %v1635 = vpack.c.b16 %v1179, %v1155
    %v1636 = vpack.c.b16 %v1180, %v1156
    %v1637 = vpack.c.b16 %v1181, %v1157
    %v1638 = vpack.c.b16 %v1182, %v1158
    %v1639 = vpack.c.b16 %v1183, %v1159
    %v1640 = vpack.c.b16 %v1184, %v1160
    %v1641 = vpack.c.b16 %v1209, %v1185
    %v1642 = vpack.c.b16 %v1210, %v1186
    %v1643 = vpack.c.b16 %v1211, %v1187
    %v1644 = vpack.c.b16 %v1212, %v1188
    %v1645 = vpack.c.b16 %v1213, %v1189
    %v1646 = vpack.c.b16 %v1214, %v1190
    %v1647 = vpack.c.b16 %v1215, %v1191
    %v1648 = vpack.c.b16 %v1216, %v1192
    %v1649 = vpack.c.b16 %v1217, %v1193
    %v1650 = vpack.c.b16 %v1218, %v1194
    %v1651 = vpack.c.b16 %v1219, %v1195
    %v1652 = vpack.c.b16 %v1220, %v1196
    %v1653 = vpack.c.b16 %v1221, %v1197
    %v1654 = vpack.c.b16 %v1222, %v1198
    %v1655 = vpack.c.b16 %v1223, %v1199
    %v1656 = vpack.c.b16 %v1224, %v1200
    %v1657 = vpack.c.b16 %v1225, %v1201
    %v1658 = vpack.c.b16 %v1226, %v1202
    %v1659 = vpack.c.b16 %v1227, %v1203
    %v1660 = vpack.c.b16 %v1228, %v1204
    %v1661 = vpack.c.b16 %v1229, %v1205
    %v1662 = vpack.c.b16 %v1230, %v1206
    %v1663 = vpack.c.b16 %v1231, %v1207
    %v1664 = vpack.c.b16 %v1232, %v1208
    %v1665 = vpack.c.b16 %v1257, %v1233
    %v1666 = vpack.c.b16 %v1258, %v1234
    %v1667 = vpack.c.b16 %v1259, %v1235
    %v1668 = vpack.c.b16 %v1260, %v1236
    %v1669 = vpack.c.b16 %v1261, %v1237
    %v1670 = vpack.c.b16 %v1262, %v1238
    %v1671 = vpack.c.b16 %v1263, %v1239
    %v1672 = vpack.c.b16 %v1264, %v1240
    %v1673 = vpack.c.b16 %v1265, %v1241
    %v1674 = vpack.c.b16 %v1266, %v1242
    %v1675 = vpack.c.b16 %v1267, %v1243
    %v1676 = vpack.c.b16 %v1268, %v1244
    %v1677 = vpack.c.b16 %v1269, %v1245
    %v1678 = vpack.c.b16 %v1270, %v1246
    %v1679 = vpack.c.b16 %v1271, %v1247
    %v1680 = vpack.c.b16 %v1272, %v1248
    %v1681 = vpack.c.b16 %v1273, %v1249
    %v1682 = vpack.c.b16 %v1274, %v1250
    %v1683 = vpack.c.b16 %v1275, %v1251
    %v1684 = vpack.c.b16 %v1276, %v1252
    %v1685 = vpack.c.b16 %v1277, %v1253
    %v1686 = vpack.c.b16 %v1278, %v1254
    %v1687 = vpack.c.b16 %v1279, %v1255
    %v1688 = vpack.c.b16 %v1280, %v1256
    %v1689 = vpack.c.b16 %v1305, %v1281
    %v1690 = vpack.c.b16 %v1306, %v1282
    %v1691 = vpack.c.b16 %v1307, %v1283
    %v1692 = vpack.c.b16 %v1308, %v1284
    %v1693 = vpack.c.b16 %v1309, %v1285
    %v1694 = vpack.c.b16 %v1310, %v1286
    %v1695 = vpack.c.b16 %v1311, %v1287
    %v1696 = vpack.c.b16 %v1312, %v1288
    %v1697 = vpack.c.b16 %v1313, %v1289
    %v1698 = vpack.c.b16 %v1314, %v1290
    %v1699 = vpack.c.b16 %v1315, %v1291
    %v1700 = vpack.c.b16 %v1316, %v1292
    %v1701 = vpack.c.b16 %v1317, %v1293
    %v1702 = vpack.c.b16 %v1318, %v1294
    %v1703 = vpack.c.b16 %v1319, %v1295
    %v1704 = vpack.c.b16 %v1320, %v1296
    %v1705 = vpack.c.b16 %v1321, %v1297
    %v1706 = vpack.c.b16 %v1322, %v1298
    %v1707 = vpack.c.b16 %v1323, %v1299
    %v1708 = vpack.c.b16 %v1324, %v1300
    %v1709 = vpack.c.b16 %v1325, %v1301
    %v1710 = vpack.c.b16 %v1326, %v1302
    %v1711 = vpack.c.b16 %v1327, %v1303
    %v1712 = vpack.c.b16 %v1328, %v1304
    %v1713 = vpack.c.b16 %v1353, %v1329
    %v1714 = vpack.c.b16 %v1354, %v1330
    %v1715 = vpack.c.b16 %v1355, %v1331
    %v1716 = vpack.c.b16 %v1356, %v1332
    %v1717 = vpack.c.b16 %v1357, %v1333
    %v1718 = vpack.c.b16 %v1358, %v1334
    %v1719 = vpack.c.b16 %v1359, %v1335
    %v1720 = vpack.c.b16 %v1360, %v1336
    %v1721 = vpack.c.b16 %v1361, %v1337
    %v1722 = vpack.c.b16 %v1362, %v1338
    %v1723 = vpack.c.b16 %v1363, %v1339
    %v1724 = vpack.c.b16 %v1364, %v1340
    %v1725 = vpack.c.b16 %v1365, %v1341
    %v1726 = vpack.c.b16 %v1366, %v1342
    %v1727 = vpack.c.b16 %v1367, %v1343
    %v1728 = vpack.c.b16 %v1368, %v1344
    %v1729 = vpack.c.b16 %v1369, %v1345
    %v1730 = vpack.c.b16 %v1370, %v1346
    %v1731 = vpack.c.b16 %v1371, %v1347
    %v1732 = vpack.c.b16 %v1372, %v1348
    %v1733 = vpack.c.b16 %v1373, %v1349
    %v1734 = vpack.c.b16 %v1374, %v1350
    %v1735 = vpack.c.b16 %v1375, %v1351
    %v1736 = vpack.c.b16 %v1376, %v1352
    %v1737 = vpack.c.b16 %v1401, %v1377
    %v1738 = vpack.c.b16 %v1402, %v1378
    %v1739 = vpack.c.b16 %v1403, %v1379
    %v1740 = vpack.c.b16 %v1404, %v1380
    %v1741 = vpack.c.b16 %v1405, %v1381
    %v1742 = vpack.c.b16 %v1406, %v1382
    %v1743 = vpack.c.b16 %v1407, %v1383
    %v1744 = vpack.c.b16 %v1408, %v1384
    %v1745 = vpack.c.b16 %v1409, %v1385
    %v1746 = vpack.c.b16 %v1410, %v1386
    %v1747 = vpack.c.b16 %v1411, %v1387
    %v1748 = vpack.c.b16 %v1412, %v1388
    %v1749 = vpack.c.b16 %v1413, %v1389
    %v1750 = vpack.c.b16 %v1414, %v1390
    %v1751 = vpack.c.b16 %v1415, %v1391
    %v1752 = vpack.c.b16 %v1416, %v1392
    %v1753 = vpack.c.b16 %v1417, %v1393
    %v1754 = vpack.c.b16 %v1418, %v1394
    %v1755 = vpack.c.b16 %v1419, %v1395
    %v1756 = vpack.c.b16 %v1420, %v1396
    %v1757 = vpack.c.b16 %v1421, %v1397
    %v1758 = vpack.c.b16 %v1422, %v1398
    %v1759 = vpack.c.b16 %v1423, %v1399
    %v1760 = vpack.c.b16 %v1424, %v1400
    %vm2073 = vcmask 728064
    %v2075 = vsel %vm2073, %v415, 0
    %vm2077 = vcmask 1043456
    %vm2078 = vcmask 1044480
    %v2079 = vsel %vm2077, 4294967295, 65535
    %v2080 = vsel %vm2078, %v2079, 0
    %v2082 = vand.u32 %v1737, %v2080
    %v2085 = vand.u32 %v1738, %v2080
    %v2088 = vand.u32 %v1739, %v2080
    %v2091 = vand.u32 %v1740, %v2080
    %v2094 = vand.u32 %v1741, %v2080
    %v2097 = vand.u32 %v1742, %v2080
    %v2100 = vand.u32 %v1743, %v2080
    %v2103 = vand.u32 %v1744, %v2080
    %v2106 = vand.u32 %v1745, %v2080
    %v2109 = vand.u32 %v1746, %v2080
    %v2112 = vand.u32 %v1747, %v2080
    %v2115 = vand.u32 %v1748, %v2080
    %v2118 = vand.u32 %v1749, %v2080
    %v2121 = vand.u32 %v1750, %v2080
    %v2124 = vand.u32 %v1751, %v2080
    %v2127 = vand.u32 %v1752, %v2080
    %v2130 = vand.u32 %v1753, %v2080
    %v2133 = vand.u32 %v1754, %v2080
    %v2136 = vand.u32 %v1755, %v2080
    %v2139 = vand.u32 %v1756, %v2080
    %v2142 = vand.u32 %v1757, %v2080
    %v2145 = vand.u32 %v1758, %v2080
    %v2148 = vand.u32 %v1759, %v2080
    %v2151 = vand.u32 %v1760, %v2080
    %2153 = vmatprep.subr.bf16.mxu0 %v1594
    %2154 = vmatpush1.bf16.msra.mxu0 %v1593
    %2155 = vmatprep.subr.bf16.mxu0 %v1570
    %2156 = vmatpush1.bf16.msra.mxu0 %v1569
    %2157 = vmatprep.subr.bf16.mxu0 %v1546
    %2158 = vmatpush1.bf16.msra.mxu0 %v1545
    %2159 = vmatprep.subr.bf16.mxu0 %v1522
    %2160 = vmatpush1.bf16.msra.mxu0 %v1521
    %2161 = vmatprep.subr.bf16.mxu0 %v1498
    %2162 = vmatpush1.bf16.msra.mxu0 %v1497
    %2163 = vmatprep.subr.bf16.mxu0 %v1474
    %2164 = vmatpush1.bf16.msra.mxu0 %v1473
    %2165 = vmatprep.subr.bf16.mxu0 %v1450
    %2166 = vmatpush1.bf16.msra.mxu0 %v1449
    %2167 = vmatprep.subr.bf16.mxu0 %v1426
    %2168 = vmatpush1.bf16.msra.mxu0 %v1425
    %2169 = vmatprep.subr.bf16.mxu0 0
    %2170 = vmatpush2.bf16.msra.mxu0 0
    %2171 = vmatprep.subr.bf16.mxu0 0
    %2172 = vmatpush2.bf16.msra.mxu0 0
    %2173 = vmatprep.subr.bf16.mxu0 %v2085
    %2174 = vmatpush2.bf16.msra.mxu0 %v2082
    %2175 = vmatprep.subr.bf16.mxu0 %v1714
    %2176 = vmatpush2.bf16.msra.mxu0 %v1713
    %2177 = vmatprep.subr.bf16.mxu0 %v1690
    %2178 = vmatpush2.bf16.msra.mxu0 %v1689
    %2179 = vmatprep.subr.bf16.mxu0 %v1666
    %2180 = vmatpush2.bf16.msra.mxu0 %v1665
    %2181 = vmatprep.subr.bf16.mxu0 %v1642
    %2182 = vmatpush2.bf16.msra.mxu0 %v1641
    %2183 = vmatprep.subr.bf16.mxu0 %v1618
    %2184 = vmatpush2.bf16.msra.mxu0 %v1617
    %2185 = vmatprep.mubr.bf16.mxu0 %v2075
    %2186 = vmatmul.mubr.bf16.gmra.mxu0 %v408
    %v2187 = vpop.f32.mrf.mxu0
    %v2188 = vadd.f32 0.0, %v2187
    %v2189 = vpop.f32.mrf.mxu0
    %v2190 = vadd.f32 0.0, %v2189
    %v2191 = vpop.f32.mrf.mxu0
    %v2192 = vpop.f32.mrf.mxu0
    %2193 = vdwg.mxu0
    %2194 = vmatprep.subr.bf16.mxu0 %v1596
    %2195 = vmatpush1.bf16.msra.mxu0 %v1595
    %2196 = vmatprep.subr.bf16.mxu0 %v1572
    %2197 = vmatpush1.bf16.msra.mxu0 %v1571
    %2198 = vmatprep.subr.bf16.mxu0 %v1548
    %2199 = vmatpush1.bf16.msra.mxu0 %v1547
    %2200 = vmatprep.subr.bf16.mxu0 %v1524
    %2201 = vmatpush1.bf16.msra.mxu0 %v1523
    %2202 = vmatprep.subr.bf16.mxu0 %v1500
    %2203 = vmatpush1.bf16.msra.mxu0 %v1499
    %2204 = vmatprep.subr.bf16.mxu0 %v1476
    %2205 = vmatpush1.bf16.msra.mxu0 %v1475
    %2206 = vmatprep.subr.bf16.mxu0 %v1452
    %2207 = vmatpush1.bf16.msra.mxu0 %v1451
    %2208 = vmatprep.subr.bf16.mxu0 %v1428
    %2209 = vmatpush1.bf16.msra.mxu0 %v1427
    %2210 = vmatprep.subr.bf16.mxu0 0
    %2211 = vmatpush2.bf16.msra.mxu0 0
    %2212 = vmatprep.subr.bf16.mxu0 0
    %2213 = vmatpush2.bf16.msra.mxu0 0
    %2214 = vmatprep.subr.bf16.mxu0 %v2091
    %2215 = vmatpush2.bf16.msra.mxu0 %v2088
    %2216 = vmatprep.subr.bf16.mxu0 %v1716
    %2217 = vmatpush2.bf16.msra.mxu0 %v1715
    %2218 = vmatprep.subr.bf16.mxu0 %v1692
    %2219 = vmatpush2.bf16.msra.mxu0 %v1691
    %2220 = vmatprep.subr.bf16.mxu0 %v1668
    %2221 = vmatpush2.bf16.msra.mxu0 %v1667
    %2222 = vmatprep.subr.bf16.mxu0 %v1644
    %2223 = vmatpush2.bf16.msra.mxu0 %v1643
    %2224 = vmatprep.subr.bf16.mxu0 %v1620
    %2225 = vmatpush2.bf16.msra.mxu0 %v1619
    %2226 = vmatprep.mubr.bf16.mxu0 %v2075
    %2227 = vmatmul.mubr.bf16.gmra.mxu0 %v408
    %v2228 = vpop.f32.mrf.mxu0
    %v2229 = vadd.f32 0.0, %v2228
    %v2230 = vpop.f32.mrf.mxu0
    %v2231 = vadd.f32 0.0, %v2230
    %v2232 = vpop.f32.mrf.mxu0
    %v2233 = vpop.f32.mrf.mxu0
    %2234 = vdwg.mxu0
    %2235 = vmatprep.subr.bf16.mxu0 %v1598
    %2236 = vmatpush1.bf16.msra.mxu0 %v1597
    %2237 = vmatprep.subr.bf16.mxu0 %v1574
    %2238 = vmatpush1.bf16.msra.mxu0 %v1573
    %2239 = vmatprep.subr.bf16.mxu0 %v1550
    %2240 = vmatpush1.bf16.msra.mxu0 %v1549
    %2241 = vmatprep.subr.bf16.mxu0 %v1526
    %2242 = vmatpush1.bf16.msra.mxu0 %v1525
    %2243 = vmatprep.subr.bf16.mxu0 %v1502
    %2244 = vmatpush1.bf16.msra.mxu0 %v1501
    %2245 = vmatprep.subr.bf16.mxu0 %v1478
    %2246 = vmatpush1.bf16.msra.mxu0 %v1477
    %2247 = vmatprep.subr.bf16.mxu0 %v1454
    %2248 = vmatpush1.bf16.msra.mxu0 %v1453
    %2249 = vmatprep.subr.bf16.mxu0 %v1430
    %2250 = vmatpush1.bf16.msra.mxu0 %v1429
    %2251 = vmatprep.subr.bf16.mxu0 0
    %2252 = vmatpush2.bf16.msra.mxu0 0
    %2253 = vmatprep.subr.bf16.mxu0 0
    %2254 = vmatpush2.bf16.msra.mxu0 0
    %2255 = vmatprep.subr.bf16.mxu0 %v2097
    %2256 = vmatpush2.bf16.msra.mxu0 %v2094
    %2257 = vmatprep.subr.bf16.mxu0 %v1718
    %2258 = vmatpush2.bf16.msra.mxu0 %v1717
    %2259 = vmatprep.subr.bf16.mxu0 %v1694
    %2260 = vmatpush2.bf16.msra.mxu0 %v1693
    %2261 = vmatprep.subr.bf16.mxu0 %v1670
    %2262 = vmatpush2.bf16.msra.mxu0 %v1669
    %2263 = vmatprep.subr.bf16.mxu0 %v1646
    %2264 = vmatpush2.bf16.msra.mxu0 %v1645
    %2265 = vmatprep.subr.bf16.mxu0 %v1622
    %2266 = vmatpush2.bf16.msra.mxu0 %v1621
    %2267 = vmatprep.mubr.bf16.mxu0 %v2075
    %2268 = vmatmul.mubr.bf16.gmra.mxu0 %v408
    %v2269 = vpop.f32.mrf.mxu0
    %v2270 = vadd.f32 0.0, %v2269
    %v2271 = vpop.f32.mrf.mxu0
    %v2272 = vadd.f32 0.0, %v2271
    %v2273 = vpop.f32.mrf.mxu0
    %v2274 = vpop.f32.mrf.mxu0
    %2275 = vdwg.mxu0
    %2276 = vmatprep.subr.bf16.mxu0 %v1600
    %2277 = vmatpush1.bf16.msra.mxu0 %v1599
    %2278 = vmatprep.subr.bf16.mxu0 %v1576
    %2279 = vmatpush1.bf16.msra.mxu0 %v1575
    %2280 = vmatprep.subr.bf16.mxu0 %v1552
    %2281 = vmatpush1.bf16.msra.mxu0 %v1551
    %2282 = vmatprep.subr.bf16.mxu0 %v1528
    %2283 = vmatpush1.bf16.msra.mxu0 %v1527
    %2284 = vmatprep.subr.bf16.mxu0 %v1504
    %2285 = vmatpush1.bf16.msra.mxu0 %v1503
    %2286 = vmatprep.subr.bf16.mxu0 %v1480
    %2287 = vmatpush1.bf16.msra.mxu0 %v1479
    %2288 = vmatprep.subr.bf16.mxu0 %v1456
    %2289 = vmatpush1.bf16.msra.mxu0 %v1455
    %2290 = vmatprep.subr.bf16.mxu0 %v1432
    %2291 = vmatpush1.bf16.msra.mxu0 %v1431
    %2292 = vmatprep.subr.bf16.mxu0 0
    %2293 = vmatpush2.bf16.msra.mxu0 0
    %2294 = vmatprep.subr.bf16.mxu0 0
    %2295 = vmatpush2.bf16.msra.mxu0 0
    %2296 = vmatprep.subr.bf16.mxu0 %v2103
    %2297 = vmatpush2.bf16.msra.mxu0 %v2100
    %2298 = vmatprep.subr.bf16.mxu0 %v1720
    %2299 = vmatpush2.bf16.msra.mxu0 %v1719
    %2300 = vmatprep.subr.bf16.mxu0 %v1696
    %2301 = vmatpush2.bf16.msra.mxu0 %v1695
    %2302 = vmatprep.subr.bf16.mxu0 %v1672
    %2303 = vmatpush2.bf16.msra.mxu0 %v1671
    %2304 = vmatprep.subr.bf16.mxu0 %v1648
    %2305 = vmatpush2.bf16.msra.mxu0 %v1647
    %2306 = vmatprep.subr.bf16.mxu0 %v1624
    %2307 = vmatpush2.bf16.msra.mxu0 %v1623
    %2308 = vmatprep.mubr.bf16.mxu0 %v2075
    %2309 = vmatmul.mubr.bf16.gmra.mxu0 %v408
    %v2310 = vpop.f32.mrf.mxu0
    %v2311 = vadd.f32 0.0, %v2310
    %v2312 = vpop.f32.mrf.mxu0
    %v2313 = vadd.f32 0.0, %v2312
    %v2314 = vpop.f32.mrf.mxu0
    %v2315 = vpop.f32.mrf.mxu0
    %2316 = vdwg.mxu0
    %2317 = vmatprep.subr.bf16.mxu0 %v1602
    %2318 = vmatpush1.bf16.msra.mxu0 %v1601
    %2319 = vmatprep.subr.bf16.mxu0 %v1578
    %2320 = vmatpush1.bf16.msra.mxu0 %v1577
    %2321 = vmatprep.subr.bf16.mxu0 %v1554
    %2322 = vmatpush1.bf16.msra.mxu0 %v1553
    %2323 = vmatprep.subr.bf16.mxu0 %v1530
    %2324 = vmatpush1.bf16.msra.mxu0 %v1529
    %2325 = vmatprep.subr.bf16.mxu0 %v1506
    %2326 = vmatpush1.bf16.msra.mxu0 %v1505
    %2327 = vmatprep.subr.bf16.mxu0 %v1482
    %2328 = vmatpush1.bf16.msra.mxu0 %v1481
    %2329 = vmatprep.subr.bf16.mxu0 %v1458
    %2330 = vmatpush1.bf16.msra.mxu0 %v1457
    %2331 = vmatprep.subr.bf16.mxu0 %v1434
    %2332 = vmatpush1.bf16.msra.mxu0 %v1433
    %2333 = vmatprep.subr.bf16.mxu0 0
    %2334 = vmatpush2.bf16.msra.mxu0 0
    %2335 = vmatprep.subr.bf16.mxu0 0
    %2336 = vmatpush2.bf16.msra.mxu0 0
    %2337 = vmatprep.subr.bf16.mxu0 %v2109
    %2338 = vmatpush2.bf16.msra.mxu0 %v2106
    %2339 = vmatprep.subr.bf16.mxu0 %v1722
    %2340 = vmatpush2.bf16.msra.mxu0 %v1721
    %2341 = vmatprep.subr.bf16.mxu0 %v1698
    %2342 = vmatpush2.bf16.msra.mxu0 %v1697
    %2343 = vmatprep.subr.bf16.mxu0 %v1674
    %2344 = vmatpush2.bf16.msra.mxu0 %v1673
    %2345 = vmatprep.subr.bf16.mxu0 %v1650
    %2346 = vmatpush2.bf16.msra.mxu0 %v1649
    %2347 = vmatprep.subr.bf16.mxu0 %v1626
    %2348 = vmatpush2.bf16.msra.mxu0 %v1625
    %2349 = vmatprep.mubr.bf16.mxu0 %v2075
    %2350 = vmatmul.mubr.bf16.gmra.mxu0 %v408
    %v2351 = vpop.f32.mrf.mxu0
    %v2352 = vadd.f32 0.0, %v2351
    %v2353 = vpop.f32.mrf.mxu0
    %v2354 = vadd.f32 0.0, %v2353
    %v2355 = vpop.f32.mrf.mxu0
    %v2356 = vpop.f32.mrf.mxu0
    %2357 = vdwg.mxu0
    %2358 = vmatprep.subr.bf16.mxu0 %v1604
    %2359 = vmatpush1.bf16.msra.mxu0 %v1603
    %2360 = vmatprep.subr.bf16.mxu0 %v1580
    %2361 = vmatpush1.bf16.msra.mxu0 %v1579
    %2362 = vmatprep.subr.bf16.mxu0 %v1556
    %2363 = vmatpush1.bf16.msra.mxu0 %v1555
    %2364 = vmatprep.subr.bf16.mxu0 %v1532
    %2365 = vmatpush1.bf16.msra.mxu0 %v1531
    %2366 = vmatprep.subr.bf16.mxu0 %v1508
    %2367 = vmatpush1.bf16.msra.mxu0 %v1507
    %2368 = vmatprep.subr.bf16.mxu0 %v1484
    %2369 = vmatpush1.bf16.msra.mxu0 %v1483
    %2370 = vmatprep.subr.bf16.mxu0 %v1460
    %2371 = vmatpush1.bf16.msra.mxu0 %v1459
    %2372 = vmatprep.subr.bf16.mxu0 %v1436
    %2373 = vmatpush1.bf16.msra.mxu0 %v1435
    %2374 = vmatprep.subr.bf16.mxu0 0
    %2375 = vmatpush2.bf16.msra.mxu0 0
    %2376 = vmatprep.subr.bf16.mxu0 0
    %2377 = vmatpush2.bf16.msra.mxu0 0
    %2378 = vmatprep.subr.bf16.mxu0 %v2115
    %2379 = vmatpush2.bf16.msra.mxu0 %v2112
    %2380 = vmatprep.subr.bf16.mxu0 %v1724
    %2381 = vmatpush2.bf16.msra.mxu0 %v1723
    %2382 = vmatprep.subr.bf16.mxu0 %v1700
    %2383 = vmatpush2.bf16.msra.mxu0 %v1699
    %2384 = vmatprep.subr.bf16.mxu0 %v1676
    %2385 = vmatpush2.bf16.msra.mxu0 %v1675
    %2386 = vmatprep.subr.bf16.mxu0 %v1652
    %2387 = vmatpush2.bf16.msra.mxu0 %v1651
    %2388 = vmatprep.subr.bf16.mxu0 %v1628
    %2389 = vmatpush2.bf16.msra.mxu0 %v1627
    %2390 = vmatprep.mubr.bf16.mxu0 %v2075
    %2391 = vmatmul.mubr.bf16.gmra.mxu0 %v408
    %v2392 = vpop.f32.mrf.mxu0
    %v2393 = vadd.f32 0.0, %v2392
    %v2394 = vpop.f32.mrf.mxu0
    %v2395 = vadd.f32 0.0, %v2394
    %v2396 = vpop.f32.mrf.mxu0
    %v2397 = vpop.f32.mrf.mxu0
    %2398 = vdwg.mxu0
    %2399 = vmatprep.subr.bf16.mxu0 %v1606
    %2400 = vmatpush1.bf16.msra.mxu0 %v1605
    %2401 = vmatprep.subr.bf16.mxu0 %v1582
    %2402 = vmatpush1.bf16.msra.mxu0 %v1581
    %2403 = vmatprep.subr.bf16.mxu0 %v1558
    %2404 = vmatpush1.bf16.msra.mxu0 %v1557
    %2405 = vmatprep.subr.bf16.mxu0 %v1534
    %2406 = vmatpush1.bf16.msra.mxu0 %v1533
    %2407 = vmatprep.subr.bf16.mxu0 %v1510
    %2408 = vmatpush1.bf16.msra.mxu0 %v1509
    %2409 = vmatprep.subr.bf16.mxu0 %v1486
    %2410 = vmatpush1.bf16.msra.mxu0 %v1485
    %2411 = vmatprep.subr.bf16.mxu0 %v1462
    %2412 = vmatpush1.bf16.msra.mxu0 %v1461
    %2413 = vmatprep.subr.bf16.mxu0 %v1438
    %2414 = vmatpush1.bf16.msra.mxu0 %v1437
    %2415 = vmatprep.subr.bf16.mxu0 0
    %2416 = vmatpush2.bf16.msra.mxu0 0
    %2417 = vmatprep.subr.bf16.mxu0 0
    %2418 = vmatpush2.bf16.msra.mxu0 0
    %2419 = vmatprep.subr.bf16.mxu0 %v2121
    %2420 = vmatpush2.bf16.msra.mxu0 %v2118
    %2421 = vmatprep.subr.bf16.mxu0 %v1726
    %2422 = vmatpush2.bf16.msra.mxu0 %v1725
    %2423 = vmatprep.subr.bf16.mxu0 %v1702
    %2424 = vmatpush2.bf16.msra.mxu0 %v1701
    %2425 = vmatprep.subr.bf16.mxu0 %v1678
    %2426 = vmatpush2.bf16.msra.mxu0 %v1677
    %2427 = vmatprep.subr.bf16.mxu0 %v1654
    %2428 = vmatpush2.bf16.msra.mxu0 %v1653
    %2429 = vmatprep.subr.bf16.mxu0 %v1630
    %2430 = vmatpush2.bf16.msra.mxu0 %v1629
    %2431 = vmatprep.mubr.bf16.mxu0 %v2075
    %2432 = vmatmul.mubr.bf16.gmra.mxu0 %v408
    %v2433 = vpop.f32.mrf.mxu0
    %v2434 = vadd.f32 0.0, %v2433
    %v2435 = vpop.f32.mrf.mxu0
    %v2436 = vadd.f32 0.0, %v2435
    %v2437 = vpop.f32.mrf.mxu0
    %v2438 = vpop.f32.mrf.mxu0
    %2439 = vdwg.mxu0
    %2440 = vmatprep.subr.bf16.mxu0 %v1608
    %2441 = vmatpush1.bf16.msra.mxu0 %v1607
    %2442 = vmatprep.subr.bf16.mxu0 %v1584
    %2443 = vmatpush1.bf16.msra.mxu0 %v1583
    %2444 = vmatprep.subr.bf16.mxu0 %v1560
    %2445 = vmatpush1.bf16.msra.mxu0 %v1559
    %2446 = vmatprep.subr.bf16.mxu0 %v1536
    %2447 = vmatpush1.bf16.msra.mxu0 %v1535
    %2448 = vmatprep.subr.bf16.mxu0 %v1512
    %2449 = vmatpush1.bf16.msra.mxu0 %v1511
    %2450 = vmatprep.subr.bf16.mxu0 %v1488
    %2451 = vmatpush1.bf16.msra.mxu0 %v1487
    %2452 = vmatprep.subr.bf16.mxu0 %v1464
    %2453 = vmatpush1.bf16.msra.mxu0 %v1463
    %2454 = vmatprep.subr.bf16.mxu0 %v1440
    %2455 = vmatpush1.bf16.msra.mxu0 %v1439
    %2456 = vmatprep.subr.bf16.mxu0 0
    %2457 = vmatpush2.bf16.msra.mxu0 0
    %2458 = vmatprep.subr.bf16.mxu0 0
    %2459 = vmatpush2.bf16.msra.mxu0 0
    %2460 = vmatprep.subr.bf16.mxu0 %v2127
    %2461 = vmatpush2.bf16.msra.mxu0 %v2124
    %2462 = vmatprep.subr.bf16.mxu0 %v1728
    %2463 = vmatpush2.bf16.msra.mxu0 %v1727
    %2464 = vmatprep.subr.bf16.mxu0 %v1704
    %2465 = vmatpush2.bf16.msra.mxu0 %v1703
    %2466 = vmatprep.subr.bf16.mxu0 %v1680
    %2467 = vmatpush2.bf16.msra.mxu0 %v1679
    %2468 = vmatprep.subr.bf16.mxu0 %v1656
    %2469 = vmatpush2.bf16.msra.mxu0 %v1655
    %2470 = vmatprep.subr.bf16.mxu0 %v1632
    %2471 = vmatpush2.bf16.msra.mxu0 %v1631
    %2472 = vmatprep.mubr.bf16.mxu0 %v2075
    %2473 = vmatmul.mubr.bf16.gmra.mxu0 %v408
    %v2474 = vpop.f32.mrf.mxu0
    %v2475 = vadd.f32 0.0, %v2474
    %v2476 = vpop.f32.mrf.mxu0
    %v2477 = vadd.f32 0.0, %v2476
    %v2478 = vpop.f32.mrf.mxu0
    %v2479 = vpop.f32.mrf.mxu0
    %2480 = vdwg.mxu0
    %2481 = vmatprep.subr.bf16.mxu0 %v1610
    %2482 = vmatpush1.bf16.msra.mxu0 %v1609
    %2483 = vmatprep.subr.bf16.mxu0 %v1586
    %2484 = vmatpush1.bf16.msra.mxu0 %v1585
    %2485 = vmatprep.subr.bf16.mxu0 %v1562
    %2486 = vmatpush1.bf16.msra.mxu0 %v1561
    %2487 = vmatprep.subr.bf16.mxu0 %v1538
    %2488 = vmatpush1.bf16.msra.mxu0 %v1537
    %2489 = vmatprep.subr.bf16.mxu0 %v1514
    %2490 = vmatpush1.bf16.msra.mxu0 %v1513
    %2491 = vmatprep.subr.bf16.mxu0 %v1490
    %2492 = vmatpush1.bf16.msra.mxu0 %v1489
    %2493 = vmatprep.subr.bf16.mxu0 %v1466
    %2494 = vmatpush1.bf16.msra.mxu0 %v1465
    %2495 = vmatprep.subr.bf16.mxu0 %v1442
    %2496 = vmatpush1.bf16.msra.mxu0 %v1441
    %2497 = vmatprep.subr.bf16.mxu0 0
    %2498 = vmatpush2.bf16.msra.mxu0 0
    %2499 = vmatprep.subr.bf16.mxu0 0
    %2500 = vmatpush2.bf16.msra.mxu0 0
    %2501 = vmatprep.subr.bf16.mxu0 %v2133
    %2502 = vmatpush2.bf16.msra.mxu0 %v2130
    %2503 = vmatprep.subr.bf16.mxu0 %v1730
    %2504 = vmatpush2.bf16.msra.mxu0 %v1729
    %2505 = vmatprep.subr.bf16.mxu0 %v1706
    %2506 = vmatpush2.bf16.msra.mxu0 %v1705
    %2507 = vmatprep.subr.bf16.mxu0 %v1682
    %2508 = vmatpush2.bf16.msra.mxu0 %v1681
    %2509 = vmatprep.subr.bf16.mxu0 %v1658
    %2510 = vmatpush2.bf16.msra.mxu0 %v1657
    %2511 = vmatprep.subr.bf16.mxu0 %v1634
    %2512 = vmatpush2.bf16.msra.mxu0 %v1633
    %2513 = vmatprep.mubr.bf16.mxu0 %v2075
    %2514 = vmatmul.mubr.bf16.gmra.mxu0 %v408
    %v2515 = vpop.f32.mrf.mxu0
    %v2516 = vadd.f32 0.0, %v2515
    %v2517 = vpop.f32.mrf.mxu0
    %v2518 = vadd.f32 0.0, %v2517
    %v2519 = vpop.f32.mrf.mxu0
    %v2520 = vpop.f32.mrf.mxu0
    %2521 = vdwg.mxu0
    %2522 = vmatprep.subr.bf16.mxu0 %v1612
    %2523 = vmatpush1.bf16.msra.mxu0 %v1611
    %2524 = vmatprep.subr.bf16.mxu0 %v1588
    %2525 = vmatpush1.bf16.msra.mxu0 %v1587
    %2526 = vmatprep.subr.bf16.mxu0 %v1564
    %2527 = vmatpush1.bf16.msra.mxu0 %v1563
    %2528 = vmatprep.subr.bf16.mxu0 %v1540
    %2529 = vmatpush1.bf16.msra.mxu0 %v1539
    %2530 = vmatprep.subr.bf16.mxu0 %v1516
    %2531 = vmatpush1.bf16.msra.mxu0 %v1515
    %2532 = vmatprep.subr.bf16.mxu0 %v1492
    %2533 = vmatpush1.bf16.msra.mxu0 %v1491
    %2534 = vmatprep.subr.bf16.mxu0 %v1468
    %2535 = vmatpush1.bf16.msra.mxu0 %v1467
    %2536 = vmatprep.subr.bf16.mxu0 %v1444
    %2537 = vmatpush1.bf16.msra.mxu0 %v1443
    %2538 = vmatprep.subr.bf16.mxu0 0
    %2539 = vmatpush2.bf16.msra.mxu0 0
    %2540 = vmatprep.subr.bf16.mxu0 0
    %2541 = vmatpush2.bf16.msra.mxu0 0
    %2542 = vmatprep.subr.bf16.mxu0 %v2139
    %2543 = vmatpush2.bf16.msra.mxu0 %v2136
    %2544 = vmatprep.subr.bf16.mxu0 %v1732
    %2545 = vmatpush2.bf16.msra.mxu0 %v1731
    %2546 = vmatprep.subr.bf16.mxu0 %v1708
    %2547 = vmatpush2.bf16.msra.mxu0 %v1707
    %2548 = vmatprep.subr.bf16.mxu0 %v1684
    %2549 = vmatpush2.bf16.msra.mxu0 %v1683
    %2550 = vmatprep.subr.bf16.mxu0 %v1660
    %2551 = vmatpush2.bf16.msra.mxu0 %v1659
    %2552 = vmatprep.subr.bf16.mxu0 %v1636
    %2553 = vmatpush2.bf16.msra.mxu0 %v1635
    %2554 = vmatprep.mubr.bf16.mxu0 %v2075
    %2555 = vmatmul.mubr.bf16.gmra.mxu0 %v408
    %v2556 = vpop.f32.mrf.mxu0
    %v2557 = vadd.f32 0.0, %v2556
    %v2558 = vpop.f32.mrf.mxu0
    %v2559 = vadd.f32 0.0, %v2558
    %v2560 = vpop.f32.mrf.mxu0
    %v2561 = vpop.f32.mrf.mxu0
    %2562 = vdwg.mxu0
    %2563 = vmatprep.subr.bf16.mxu0 %v1614
    %2564 = vmatpush1.bf16.msra.mxu0 %v1613
    %2565 = vmatprep.subr.bf16.mxu0 %v1590
    %2566 = vmatpush1.bf16.msra.mxu0 %v1589
    %2567 = vmatprep.subr.bf16.mxu0 %v1566
    %2568 = vmatpush1.bf16.msra.mxu0 %v1565
    %2569 = vmatprep.subr.bf16.mxu0 %v1542
    %2570 = vmatpush1.bf16.msra.mxu0 %v1541
    %2571 = vmatprep.subr.bf16.mxu0 %v1518
    %2572 = vmatpush1.bf16.msra.mxu0 %v1517
    %2573 = vmatprep.subr.bf16.mxu0 %v1494
    %2574 = vmatpush1.bf16.msra.mxu0 %v1493
    %2575 = vmatprep.subr.bf16.mxu0 %v1470
    %2576 = vmatpush1.bf16.msra.mxu0 %v1469
    %2577 = vmatprep.subr.bf16.mxu0 %v1446
    %2578 = vmatpush1.bf16.msra.mxu0 %v1445
    %2579 = vmatprep.subr.bf16.mxu0 0
    %2580 = vmatpush2.bf16.msra.mxu0 0
    %2581 = vmatprep.subr.bf16.mxu0 0
    %2582 = vmatpush2.bf16.msra.mxu0 0
    %2583 = vmatprep.subr.bf16.mxu0 %v2145
    %2584 = vmatpush2.bf16.msra.mxu0 %v2142
    %2585 = vmatprep.subr.bf16.mxu0 %v1734
    %2586 = vmatpush2.bf16.msra.mxu0 %v1733
    %2587 = vmatprep.subr.bf16.mxu0 %v1710
    %2588 = vmatpush2.bf16.msra.mxu0 %v1709
    %2589 = vmatprep.subr.bf16.mxu0 %v1686
    %2590 = vmatpush2.bf16.msra.mxu0 %v1685
    %2591 = vmatprep.subr.bf16.mxu0 %v1662
    %2592 = vmatpush2.bf16.msra.mxu0 %v1661
    %2593 = vmatprep.subr.bf16.mxu0 %v1638
    %2594 = vmatpush2.bf16.msra.mxu0 %v1637
    %2595 = vmatprep.mubr.bf16.mxu0 %v2075
    %2596 = vmatmul.mubr.bf16.gmra.mxu0 %v408
    %v2597 = vpop.f32.mrf.mxu0
    %v2598 = vadd.f32 0.0, %v2597
    %v2599 = vpop.f32.mrf.mxu0
    %v2600 = vadd.f32 0.0, %v2599
    %v2601 = vpop.f32.mrf.mxu0
    %v2602 = vpop.f32.mrf.mxu0
    %2603 = vdwg.mxu0
    %2604 = vmatprep.subr.bf16.mxu0 %v1616
    %2605 = vmatpush1.bf16.msra.mxu0 %v1615
    %2606 = vmatprep.subr.bf16.mxu0 %v1592
    %2607 = vmatpush1.bf16.msra.mxu0 %v1591
    %2608 = vmatprep.subr.bf16.mxu0 %v1568
    %2609 = vmatpush1.bf16.msra.mxu0 %v1567
    %2610 = vmatprep.subr.bf16.mxu0 %v1544
    %2611 = vmatpush1.bf16.msra.mxu0 %v1543
    %2612 = vmatprep.subr.bf16.mxu0 %v1520
    %2613 = vmatpush1.bf16.msra.mxu0 %v1519
    %2614 = vmatprep.subr.bf16.mxu0 %v1496
    %2615 = vmatpush1.bf16.msra.mxu0 %v1495
    %2616 = vmatprep.subr.bf16.mxu0 %v1472
    %2617 = vmatpush1.bf16.msra.mxu0 %v1471
    %2618 = vmatprep.subr.bf16.mxu0 %v1448
    %2619 = vmatpush1.bf16.msra.mxu0 %v1447
    %2620 = vmatprep.subr.bf16.mxu0 0
    %2621 = vmatpush2.bf16.msra.mxu0 0
    %2622 = vmatprep.subr.bf16.mxu0 0
    %2623 = vmatpush2.bf16.msra.mxu0 0
    %2624 = vmatprep.subr.bf16.mxu0 %v2151
    %2625 = vmatpush2.bf16.msra.mxu0 %v2148
    %2626 = vmatprep.subr.bf16.mxu0 %v1736
    %2627 = vmatpush2.bf16.msra.mxu0 %v1735
    %2628 = vmatprep.subr.bf16.mxu0 %v1712
    %2629 = vmatpush2.bf16.msra.mxu0 %v1711
    %2630 = vmatprep.subr.bf16.mxu0 %v1688
    %2631 = vmatpush2.bf16.msra.mxu0 %v1687
    %2632 = vmatprep.subr.bf16.mxu0 %v1664
    %2633 = vmatpush2.bf16.msra.mxu0 %v1663
    %2634 = vmatprep.subr.bf16.mxu0 %v1640
    %2635 = vmatpush2.bf16.msra.mxu0 %v1639
    %2636 = vmatprep.mubr.bf16.mxu0 %v2075
    %2637 = vmatmul.mubr.bf16.gmra.mxu0 %v408
    %v2638 = vpop.f32.mrf.mxu0
    %v2639 = vadd.f32 0.0, %v2638
    %v2640 = vpop.f32.mrf.mxu0
    %v2641 = vadd.f32 0.0, %v2640
    %v2642 = vpop.f32.mrf.mxu0
    %v2643 = vpop.f32.mrf.mxu0
    %2644 = vdwg.mxu0
    %v2648 = vlaneseq
    %v2649 = vshrl.u32 %v2648, 7
    %v2650 = vsub.s32 0, %v2649
    %v2651 = vrot.slane %v53, %v2650
    %v2652 = vlaneseq
    %v2653 = vshrl.u32 %v2652, 7
    %v2654 = vsub.s32 1, %v2653
    %v2655 = vrot.slane %v53, %v2654
    %v2656 = vlaneseq
    %v2657 = vshrl.u32 %v2656, 7
    %v2658 = vsub.s32 2, %v2657
    %v2659 = vrot.slane %v53, %v2658
    %v2660 = vlaneseq
    %v2661 = vshrl.u32 %v2660, 7
    %v2662 = vsub.s32 3, %v2661
    %v2663 = vrot.slane %v53, %v2662
    %v2664 = vlaneseq
    %v2665 = vshrl.u32 %v2664, 7
    %v2666 = vsub.s32 4, %v2665
    %v2667 = vrot.slane %v53, %v2666
    %v2668 = vlaneseq
    %v2669 = vshrl.u32 %v2668, 7
    %v2670 = vsub.s32 5, %v2669
    %v2671 = vrot.slane %v53, %v2670
    %v2672 = vlaneseq
    %v2673 = vshrl.u32 %v2672, 7
    %v2674 = vsub.s32 6, %v2673
    %v2675 = vrot.slane %v53, %v2674
    %v2676 = vlaneseq
    %v2677 = vshrl.u32 %v2676, 7
    %v2678 = vsub.s32 7, %v2677
    %v2679 = vrot.slane %v53, %v2678
    %v2680 = vlaneseq
    %v2681 = vshrl.u32 %v2680, 7
    %v2682 = vsub.s32 0, %v2681
    %v2683 = vrot.slane %v54, %v2682
    %v2684 = vlaneseq
    %v2685 = vshrl.u32 %v2684, 7
    %v2686 = vsub.s32 1, %v2685
    %v2687 = vrot.slane %v54, %v2686
    %v2688 = vlaneseq
    %v2689 = vshrl.u32 %v2688, 7
    %v2690 = vsub.s32 2, %v2689
    %v2691 = vrot.slane %v54, %v2690
    %v2692 = vlaneseq
    %v2693 = vshrl.u32 %v2692, 7
    %v2694 = vsub.s32 3, %v2693
    %v2695 = vrot.slane %v54, %v2694
    %v2696 = vlaneseq
    %v2697 = vshrl.u32 %v2696, 7
    %v2698 = vsub.s32 4, %v2697
    %v2699 = vrot.slane %v54, %v2698
    %v2700 = vlaneseq
    %v2701 = vshrl.u32 %v2700, 7
    %v2702 = vsub.s32 5, %v2701
    %v2703 = vrot.slane %v54, %v2702
    %v2704 = vlaneseq
    %v2705 = vshrl.u32 %v2704, 7
    %v2706 = vsub.s32 6, %v2705
    %v2707 = vrot.slane %v54, %v2706
    %v2708 = vlaneseq
    %v2709 = vshrl.u32 %v2708, 7
    %v2710 = vsub.s32 7, %v2709
    %v2711 = vrot.slane %v54, %v2710
    %v2712 = vlaneseq
    %v2713 = vshrl.u32 %v2712, 7
    %v2714 = vsub.s32 0, %v2713
    %v2715 = vrot.slane %v55, %v2714
    %v2716 = vlaneseq
    %v2717 = vshrl.u32 %v2716, 7
    %v2718 = vsub.s32 1, %v2717
    %v2719 = vrot.slane %v55, %v2718
    %v2720 = vlaneseq
    %v2721 = vshrl.u32 %v2720, 7
    %v2722 = vsub.s32 2, %v2721
    %v2723 = vrot.slane %v55, %v2722
    %v2724 = vlaneseq
    %v2725 = vshrl.u32 %v2724, 7
    %v2726 = vsub.s32 3, %v2725
    %v2727 = vrot.slane %v55, %v2726
    %v2728 = vlaneseq
    %v2729 = vshrl.u32 %v2728, 7
    %v2730 = vsub.s32 4, %v2729
    %v2731 = vrot.slane %v55, %v2730
    %v2732 = vlaneseq
    %v2733 = vshrl.u32 %v2732, 7
    %v2734 = vsub.s32 5, %v2733
    %v2735 = vrot.slane %v55, %v2734
    %v2736 = vlaneseq
    %v2737 = vshrl.u32 %v2736, 7
    %v2738 = vsub.s32 6, %v2737
    %v2739 = vrot.slane %v55, %v2738
    %v2740 = vlaneseq
    %v2741 = vshrl.u32 %v2740, 7
    %v2742 = vsub.s32 7, %v2741
    %v2743 = vrot.slane %v55, %v2742
    %v2768 = vadd.f32 %v2651, %v2188
    %v2769 = vadd.f32 %v2655, %v2190
    %v2770 = vadd.f32 %v2659, %v2229
    %v2771 = vadd.f32 %v2663, %v2231
    %v2772 = vadd.f32 %v2667, %v2270
    %v2773 = vadd.f32 %v2671, %v2272
    %v2774 = vadd.f32 %v2675, %v2311
    %v2775 = vadd.f32 %v2679, %v2313
    %v2776 = vadd.f32 %v2683, %v2352
    %v2777 = vadd.f32 %v2687, %v2354
    %v2778 = vadd.f32 %v2691, %v2393
    %v2779 = vadd.f32 %v2695, %v2395
    %v2780 = vadd.f32 %v2699, %v2434
    %v2781 = vadd.f32 %v2703, %v2436
    %v2782 = vadd.f32 %v2707, %v2475
    %v2783 = vadd.f32 %v2711, %v2477
    %v2784 = vadd.f32 %v2715, %v2516
    %v2785 = vadd.f32 %v2719, %v2518
    %v2786 = vadd.f32 %v2723, %v2557
    %v2787 = vadd.f32 %v2727, %v2559
    %v2788 = vadd.f32 %v2731, %v2598
    %v2789 = vadd.f32 %v2735, %v2600
    %v2790 = vadd.f32 %v2739, %v2639
    %v2791 = vadd.f32 %v2743, %v2641
    %v2816 = vcombine.low %v2768, %v2769
    %v2817 = vcombine.low %v2770, %v2771
    %v2819 = vunpack.c.l.s4 1983009808
    %v2820 = vunpack.c.0.s8 %v2819
    %v2821 = vlaneseq
    %v2822 = vshrl.u32 %v2821, 7
    %v2823 = vsub.s32 %v2820, %v2822
    %v2824 = vrot.slane %v2816, %v2823
    %v2826 = vunpack.c.l.s4 1983009808
    %v2827 = vunpack.c.0.s8 %v2826
    %v2828 = vlaneseq
    %v2829 = vshrl.u32 %v2828, 7
    %v2830 = vsub.s32 %v2827, %v2829
    %v2831 = vrot.slane %v2817, %v2830
    %v2832 = vcombine.low %v2824, %v2831
    %v2833 = vcombine.low %v2772, %v2773
    %v2834 = vcombine.low %v2774, %v2775
    %v2836 = vunpack.c.l.s4 1983009808
    %v2837 = vunpack.c.0.s8 %v2836
    %v2838 = vlaneseq
    %v2839 = vshrl.u32 %v2838, 7
    %v2840 = vsub.s32 %v2837, %v2839
    %v2841 = vrot.slane %v2833, %v2840
    %v2843 = vunpack.c.l.s4 1983009808
    %v2844 = vunpack.c.0.s8 %v2843
    %v2845 = vlaneseq
    %v2846 = vshrl.u32 %v2845, 7
    %v2847 = vsub.s32 %v2844, %v2846
    %v2848 = vrot.slane %v2834, %v2847
    %v2849 = vcombine.low %v2841, %v2848
    %v2850 = vcombine.low %v2776, %v2777
    %v2851 = vcombine.low %v2778, %v2779
    %v2853 = vunpack.c.l.s4 1983009808
    %v2854 = vunpack.c.0.s8 %v2853
    %v2855 = vlaneseq
    %v2856 = vshrl.u32 %v2855, 7
    %v2857 = vsub.s32 %v2854, %v2856
    %v2858 = vrot.slane %v2850, %v2857
    %v2860 = vunpack.c.l.s4 1983009808
    %v2861 = vunpack.c.0.s8 %v2860
    %v2862 = vlaneseq
    %v2863 = vshrl.u32 %v2862, 7
    %v2864 = vsub.s32 %v2861, %v2863
    %v2865 = vrot.slane %v2851, %v2864
    %v2866 = vcombine.low %v2858, %v2865
    %v2867 = vcombine.low %v2780, %v2781
    %v2868 = vcombine.low %v2782, %v2783
    %v2870 = vunpack.c.l.s4 1983009808
    %v2871 = vunpack.c.0.s8 %v2870
    %v2872 = vlaneseq
    %v2873 = vshrl.u32 %v2872, 7
    %v2874 = vsub.s32 %v2871, %v2873
    %v2875 = vrot.slane %v2867, %v2874
    %v2877 = vunpack.c.l.s4 1983009808
    %v2878 = vunpack.c.0.s8 %v2877
    %v2879 = vlaneseq
    %v2880 = vshrl.u32 %v2879, 7
    %v2881 = vsub.s32 %v2878, %v2880
    %v2882 = vrot.slane %v2868, %v2881
    %v2883 = vcombine.low %v2875, %v2882
    %v2884 = vcombine.low %v2784, %v2785
    %v2885 = vcombine.low %v2786, %v2787
    %v2887 = vunpack.c.l.s4 1983009808
    %v2888 = vunpack.c.0.s8 %v2887
    %v2889 = vlaneseq
    %v2890 = vshrl.u32 %v2889, 7
    %v2891 = vsub.s32 %v2888, %v2890
    %v2892 = vrot.slane %v2884, %v2891
    %v2894 = vunpack.c.l.s4 1983009808
    %v2895 = vunpack.c.0.s8 %v2894
    %v2896 = vlaneseq
    %v2897 = vshrl.u32 %v2896, 7
    %v2898 = vsub.s32 %v2895, %v2897
    %v2899 = vrot.slane %v2885, %v2898
    %v2900 = vcombine.low %v2892, %v2899
    %v2901 = vcombine.low %v2788, %v2789
    %v2902 = vcombine.low %v2790, %v2791
    %v2904 = vunpack.c.l.s4 1983009808
    %v2905 = vunpack.c.0.s8 %v2904
    %v2906 = vlaneseq
    %v2907 = vshrl.u32 %v2906, 7
    %v2908 = vsub.s32 %v2905, %v2907
    %v2909 = vrot.slane %v2901, %v2908
    %v2911 = vunpack.c.l.s4 1983009808
    %v2912 = vunpack.c.0.s8 %v2911
    %v2913 = vlaneseq
    %v2914 = vshrl.u32 %v2913, 7
    %v2915 = vsub.s32 %v2912, %v2914
    %v2916 = vrot.slane %v2902, %v2915
    %v2917 = vcombine.low %v2909, %v2916
    %2924 = vst [vmem:[#allocation8] sm:$0xff] %v2832
    %2925 = vst [vmem:[#allocation8 + $0x8] sm:$0xff] %v2849
    %2926 = vst [vmem:[#allocation8 + $0x10] sm:$0xff] %v2866
    %2927 = vst [vmem:[#allocation8 + $0x18] sm:$0xff] %v2883
    %2928 = vst [vmem:[#allocation8 + $0x20] sm:$0xff] %v2900
    %2929 = vst [vmem:[#allocation8 + $0x28] sm:$0xff] %v2917
    // Predicated region
    $region26: #{tpu_custom_call.1} parent=1 // pred_check
      _
    $region27: #{tpu_custom_call.1} parent=1 // pred_check_branch
      %2931 = sbr.rel (0) target = $region29
    $region28: #{tpu_custom_call.1} parent=1 // pred_region
      %s2933 = ssub.s32 768, 768
      %2934 = vsyncadd [#allocation4], %s2933
      %s2936 = sshll.u32 [#allocation8], 4
      %s2937 = int_to_ptr.vmem [resolvable:$true] %s2936
      %2939 = dma.vmem_to_hbm [thread:$0]  %s2937, 768, %s3, [#allocation4]
    $region29: #{tpu_custom_call.1} parent=1 // pred_fallthru
      _
    // Predicated region
    $region30: #{tpu_custom_call.1} parent=1 // pred_check
      _
    $region31: #{tpu_custom_call.1} parent=1 // pred_check_branch
      %2941 = sbr.rel (0) target = $region33
    $region32: #{tpu_custom_call.1} parent=1 // pred_region
      %2942 = dma.done [#allocation4], 768
    $region33: #{tpu_custom_call.1} parent=1 // pred_fallthru
      _
    %2943 = vsyncpa [#allocation3], 1
    %2944 = vsyncpa [#allocation6], 1
    %2945 = vsyncpa [#allocation4], 1

</llo_original>
